<compile_context>
chip_gen: v5e
topology: v5e:2x2
jax: 0.10.0
libtpu: 0.0.40
codegen_flags: <defaults>
</compile_context>

<pallas_src>
import functools
import math

import jax
import jax.numpy as jnp
from jax.experimental import pallas as pl
from jax.experimental.pallas import tpu as pltpu

LN_EPS = 1e-5


def _block_kernel(q_ref, kv_ref, wq2_ref, wkv_ref, wo2_ref, w1_ref, w2_ref,
                  vec_ref, out_ref, *, batch, num_heads):
    """Whole batch in one block: LN -> cross-MHA -> res+LN -> FFN -> res+LN."""
    xf = q_ref[...].astype(jnp.float32)        # (B*Lq, E)
    kvf = kv_ref[...].astype(jnp.float32)      # (B*Lk, E)

    embed = xf.shape[-1]
    e2 = 2 * embed
    dff = w1_ref.shape[-1]
    head_dim = embed // num_heads
    lq = xf.shape[0] // batch
    lk = kvf.shape[0] // batch

    # Packed bias / LayerNorm vectors (static slices of one operand).
    vec = vec_ref[...].astype(jnp.float32)     # (9, max(2E, F))
    ln1_g = vec[0:1, :embed]
    ln1_b = vec[1:2, :embed]
    bq2 = vec[2:3, :e2]
    bkv = vec[3:4, :e2]
    bo = vec[4:5, :embed]
    ln2_g = vec[5:6, :embed]
    ln2_b = vec[6:7, :embed]
    b1 = vec[7:8, :dff]
    b2 = vec[8:9, :embed]

    def layernorm(v, g, b):
        mu = jnp.mean(v, axis=-1, keepdims=True)
        var = jnp.mean((v - mu) ** 2, axis=-1, keepdims=True)
        return (v - mu) * jax.lax.rsqrt(var + LN_EPS) * g + b

    # --- cross-attention block on norm1(x) ---
    n1 = layernorm(xf, ln1_g, ln1_b)

    # Single wide projections: Q padded to 2E (upper half zero), K|V fused.
    q2 = jnp.dot(n1, wq2_ref[...], preferred_element_type=jnp.float32) + bq2    # (B*Lq, 2E)
    kvp = jnp.dot(kvf, wkv_ref[...], preferred_element_type=jnp.float32) + bkv  # (B*Lk, 2E)

    q3 = q2.reshape(batch, lq, e2)
    kv3 = kvp.reshape(batch, lk, e2)

    scale = 1.0 / math.sqrt(head_dim)
    # Column-index iota (hoisted once); per-head column masks are cheap VPU ops,
    # avoiding any lane-slice / concat relayouts through the XLU.
    col = jax.lax.broadcasted_iota(jnp.int32, (1, 1, e2), 2)

    o2 = jnp.zeros((batch, lq, e2), jnp.float32)
    for h in range(num_heads):                 # H=4, unrolled
        k_lo = h * head_dim
        v_lo = embed + h * head_dim
        kmask = ((col >= k_lo) & (col < k_lo + head_dim)).astype(jnp.float32)
        vmask = ((col >= v_lo) & (col < v_lo + head_dim)).astype(jnp.float32)

        s = jnp.einsum("bqd,bkd->bqk", q3 * kmask, kv3,
                       preferred_element_type=jnp.float32) * scale
        s = s - jnp.max(s, axis=-1, keepdims=True)
        p = jnp.exp(s)
        # Exact normalization (approx reciprocal would risk the 1e-4 tolerance).
        p = p / jnp.sum(p, axis=-1, keepdims=True)
        # Head-h output lands in its own (disjoint) column range of o2's upper half.
        o2 = o2 + jnp.einsum("bqk,bkd->bqd", p, kv3 * vmask,
                             preferred_element_type=jnp.float32)

    # Output projection: wo2 has zero rows for o2's (all-zero) lower half.
    att = jnp.dot(o2.reshape(batch * lq, e2), wo2_ref[...],
                  preferred_element_type=jnp.float32) + bo                      # (B*Lq, E)

    # x = norm1(x + crossatt_block(norm1(x)))
    x1 = layernorm(xf + att, ln1_g, ln1_b)

    # --- feed-forward block ---
    h1 = jnp.dot(x1, w1_ref[...], preferred_element_type=jnp.float32) + b1
    h1 = jnp.maximum(h1, 0.0)                  # relu
    ff = jnp.dot(h1, w2_ref[...], preferred_element_type=jnp.float32) + b2

    # x = norm2(x + ff_block(x))
    x2 = layernorm(x1 + ff, ln2_g, ln2_b)

    out_ref[...] = x2.astype(out_ref.dtype)


def trans_with_cross_att(query, key_value, params, *, num_heads):
    B, Lq, E = query.shape
    _, Lk, _ = key_value.shape
    F = params["w1_t"].shape[1]
    E2 = 2 * E
    W = max(E2, F)

    # ---- wrapper-side weight packing (free: runs in XLA once) ----
    zE = jnp.zeros((E, E), jnp.float32)
    wq2 = jnp.concatenate([params["wq_t"], zE], axis=1)                 # (E, 2E)
    wkv = jnp.concatenate([params["wk_t"], params["wv_t"]], axis=1)     # (E, 2E)
    wo2 = jnp.concatenate([zE, params["wo_t"]], axis=0)                 # (2E, E)

    def row(v):
        v = v.reshape(1, -1)
        return jnp.pad(v, ((0, 0), (0, W - v.shape[1])))

    bq2 = jnp.concatenate([params["bq"].reshape(1, E),
                           jnp.zeros((1, E), jnp.float32)], axis=1)
    bkv = jnp.concatenate([params["bk"].reshape(1, E),
                           params["bv"].reshape(1, E)], axis=1)
    vec = jnp.concatenate([
        row(params["ln1_g"]), row(params["ln1_b"]),
        row(bq2), row(bkv), row(params["bo"]),
        row(params["ln2_g"]), row(params["ln2_b"]),
        row(params["b1"]), row(params["b2"]),
    ], axis=0)                                                          # (9, W)

    # Fold batch into the row dimension (wrapper reshape, free).
    qf = query.reshape(B * Lq, E)
    kvf = key_value.reshape(B * Lk, E)

    weights = [wq2, wkv, wo2, params["w1_t"], params["w2_t"], vec]

    def full_spec(shape):
        return pl.BlockSpec(shape, lambda i, _n=len(shape): (0,) * _n)

    in_specs = [full_spec(qf.shape), full_spec(kvf.shape)] + \
               [full_spec(tuple(w.shape)) for w in weights]
    out_specs = full_spec((B * Lq, E))

    kernel = functools.partial(_block_kernel, batch=B, num_heads=num_heads)

    # Advisory cost estimate (flops include the zero-padded 2E contractions).
    mha_proj = 2 * (B * Lq) * E * E2 + 2 * (B * Lk) * E * E2 + 2 * (B * Lq) * E2 * E
    attn_core = num_heads * 2 * (2 * B * Lq * Lk * E2)
    ffn = 2 * (B * Lq) * E * F * 2
    flops = mha_proj + attn_core + ffn
    transcendentals = num_heads * B * Lq * Lk + 3 * B * Lq
    bytes_accessed = 4 * (qf.size + kvf.size + sum(int(w.size) for w in weights)
                          + B * Lq * E)

    out = pl.pallas_call(
        kernel,
        out_shape=jax.ShapeDtypeStruct((B * Lq, E), jnp.float32),
        grid=(1,),
        in_specs=in_specs,
        out_specs=out_specs,
        compiler_params=pltpu.CompilerParams(dimension_semantics=("arbitrary",)),
        cost_estimate=pl.CostEstimate(flops=flops,
                                      transcendentals=transcendentals,
                                      bytes_accessed=bytes_accessed),
    )(qf, kvf, *weights)
    return out.reshape(B, Lq, E)


def reference(query, key_value, p, *, num_heads):
    """Pure-JAX reference mirroring the PyTorch forward (eval mode, no masks)."""
    def ln(v, g, b):
        mu = v.mean(-1, keepdims=True)
        var = ((v - mu) ** 2).mean(-1, keepdims=True)
        return (v - mu) / jnp.sqrt(var + LN_EPS) * g + b

    B, Lq, E = query.shape
    Lk = key_value.shape[1]
    Dh = E // num_heads

    x = query
    n1 = ln(x, p["ln1_g"], p["ln1_b"])
    q = n1 @ p["wq_t"] + p["bq"]
    k = key_value @ p["wk_t"] + p["bk"]
    v = key_value @ p["wv_t"] + p["bv"]
    qh = q.reshape(B, Lq, num_heads, Dh).transpose(0, 2, 1, 3)
    kh = k.reshape(B, Lk, num_heads, Dh).transpose(0, 2, 1, 3)
    vh = v.reshape(B, Lk, num_heads, Dh).transpose(0, 2, 1, 3)
    s = jnp.einsum("bhqd,bhkd->bhqk", qh, kh) / math.sqrt(Dh)
    pa = jax.nn.softmax(s, axis=-1)
    o = jnp.einsum("bhqk,bhkd->bhqd", pa, vh).transpose(0, 2, 1, 3).reshape(B, Lq, E)
    att = o @ p["wo_t"] + p["bo"]
    x1 = ln(x + att, p["ln1_g"], p["ln1_b"])
    ff = jnp.maximum(x1 @ p["w1_t"] + p["b1"], 0.0) @ p["w2_t"] + p["b2"]
    return ln(x1 + ff, p["ln2_g"], p["ln2_b"])


def make_params(key, embed_dim, dim_feedforward):
    """Deterministic synthetic parameters (shapes from the module __init__)."""
    E, F = embed_dim, dim_feedforward
    ks = jax.random.split(key, 12)

    def u(k, shape, scale):
        return jax.random.uniform(k, shape, jnp.float32, -scale, scale)

    # MultiheadAttention: in_proj_weight (3E, E), in_proj_bias (3E,),
    #                     out_proj (E, E) + (E,)
    in_proj_w = u(ks[0], (3 * E, E), 1.0 / math.sqrt(E))
    in_proj_b = u(ks[1], (3 * E,), 1.0 / math.sqrt(E))
    out_proj_w = u(ks[2], (E, E), 1.0 / math.sqrt(E))
    out_proj_b = u(ks[3], (E,), 1.0 / math.sqrt(E))
    lin1_w = u(ks[4], (F, E), 1.0 / math.sqrt(E))
    lin1_b = u(ks[5], (F,), 1.0 / math.sqrt(E))
    lin2_w = u(ks[6], (E, F), 1.0 / math.sqrt(F))
    lin2_b = u(ks[7], (E,), 1.0 / math.sqrt(F))
    ln1_g = 1.0 + 0.05 * u(ks[8], (E,), 1.0)
    ln1_b = 0.05 * u(ks[9], (E,), 1.0)
    ln2_g = 1.0 + 0.05 * u(ks[10], (E,), 1.0)
    ln2_b = 0.05 * u(ks[11], (E,), 1.0)

    wq, wk, wv = in_proj_w[:E], in_proj_w[E:2 * E], in_proj_w[2 * E:]
    bq, bk, bv = in_proj_b[:E], in_proj_b[E:2 * E], in_proj_b[2 * E:]

    # Pre-transpose so kernels compute x @ W (PyTorch Linear is x @ W^T + b).
    return {
        "ln1_g": ln1_g.reshape(1, E), "ln1_b": ln1_b.reshape(1, E),
        "wq_t": wq.T, "bq": bq.reshape(1, E),
        "wk_t": wk.T, "bk": bk.reshape(1, E),
        "wv_t": wv.T, "bv": bv.reshape(1, E),
        "wo_t": out_proj_w.T, "bo": out_proj_b.reshape(1, E),
        "ln2_g": ln2_g.reshape(1, E), "ln2_b": ln2_b.reshape(1, E),
        "w1_t": lin1_w.T, "b1": lin1_b.reshape(1, F),
        "w2_t": lin2_w.T, "b2": lin2_b.reshape(1, E),
    }


if __name__ == "__main__":
    # args: att_hidden_size=32, num_head=4, dim_feedforward=64
    B, Lq, Lk, E, H, F = 2, 8, 12, 32, 4, 64

    key = jax.random.PRNGKey(0)
    k_q, k_kv, k_p = jax.random.split(key, 3)
    query = jax.random.normal(k_q, (B, Lq, E), jnp.float32)
    key_value = jax.random.normal(k_kv, (B, Lk, E), jnp.float32)
    params = make_params(k_p, E, F)

    out = trans_with_cross_att(query, key_value, params, num_heads=H)
    out = jax.block_until_ready(out)

    ref = reference(query, key_value, params, num_heads=H)
    assert out.shape == (B, Lq, E)
    assert jnp.allclose(out, ref, atol=1e-4, rtol=1e-4), "mismatch vs reference"

    print("KERNEL_OK")
</pallas_src>

<mosaic_0001>
module attributes {stable_mosaic.version = 11 : i64} {
  func.func @_block_kernel(%arg0: i32, %arg1: memref<16x32xf32, #tpu.memory_space<vmem>>, %arg2: memref<24x32xf32, #tpu.memory_space<vmem>>, %arg3: memref<32x64xf32, #tpu.memory_space<vmem>>, %arg4: memref<32x64xf32, #tpu.memory_space<vmem>>, %arg5: memref<64x32xf32, #tpu.memory_space<vmem>>, %arg6: memref<32x64xf32, #tpu.memory_space<vmem>>, %arg7: memref<64x32xf32, #tpu.memory_space<vmem>>, %arg8: memref<9x64xf32, #tpu.memory_space<vmem>>, %arg9: memref<16x32xf32, #tpu.memory_space<vmem>>) attributes {dimension_semantics = [#tpu.dimension_semantics<arbitrary>], iteration_bounds = array<i64: 1>, scalar_prefetch = 0 : i64, scratch_operands = 0 : i64, tpu.core_type = #tpu.core_type<tc>, window_params = [{pipeline_mode = #tpu.pipeline_mode<synchronous>, transform_indices = @transform_0, window_bounds = array<i64: 16, 32>}, {pipeline_mode = #tpu.pipeline_mode<synchronous>, transform_indices = @transform_1, window_bounds = array<i64: 24, 32>}, {pipeline_mode = #tpu.pipeline_mode<synchronous>, transform_indices = @transform_2, window_bounds = array<i64: 32, 64>}, {pipeline_mode = #tpu.pipeline_mode<synchronous>, transform_indices = @transform_3, window_bounds = array<i64: 32, 64>}, {pipeline_mode = #tpu.pipeline_mode<synchronous>, transform_indices = @transform_4, window_bounds = array<i64: 64, 32>}, {pipeline_mode = #tpu.pipeline_mode<synchronous>, transform_indices = @transform_5, window_bounds = array<i64: 32, 64>}, {pipeline_mode = #tpu.pipeline_mode<synchronous>, transform_indices = @transform_6, window_bounds = array<i64: 64, 32>}, {pipeline_mode = #tpu.pipeline_mode<synchronous>, transform_indices = @transform_7, window_bounds = array<i64: 9, 64>}, {pipeline_mode = #tpu.pipeline_mode<synchronous>, transform_indices = @transform_8, window_bounds = array<i64: 16, 32>}]} {
    %c0 = arith.constant 0 : index
    %c0_0 = arith.constant 0 : index
    %0 = vector.load %arg1[%c0, %c0_0] : memref<16x32xf32, #tpu.memory_space<vmem>>, vector<16x32xf32>
    %c0_1 = arith.constant 0 : index
    %c0_2 = arith.constant 0 : index
    %1 = vector.load %arg2[%c0_1, %c0_2] : memref<24x32xf32, #tpu.memory_space<vmem>>, vector<24x32xf32>
    %c0_3 = arith.constant 0 : index
    %c0_4 = arith.constant 0 : index
    %2 = vector.load %arg8[%c0_3, %c0_4] : memref<9x64xf32, #tpu.memory_space<vmem>>, vector<9x64xf32>
    %3 = vector.extract_strided_slice %2 {offsets = [0, 0], sizes = [1, 32], strides = [1, 1]} : vector<9x64xf32> to vector<1x32xf32>
    %4 = vector.extract_strided_slice %2 {offsets = [1, 0], sizes = [1, 32], strides = [1, 1]} : vector<9x64xf32> to vector<1x32xf32>
    %5 = vector.extract_strided_slice %2 {offsets = [2, 0], sizes = [1, 64], strides = [1, 1]} : vector<9x64xf32> to vector<1x64xf32>
    %6 = vector.extract_strided_slice %2 {offsets = [3, 0], sizes = [1, 64], strides = [1, 1]} : vector<9x64xf32> to vector<1x64xf32>
    %7 = vector.extract_strided_slice %2 {offsets = [4, 0], sizes = [1, 32], strides = [1, 1]} : vector<9x64xf32> to vector<1x32xf32>
    %8 = vector.extract_strided_slice %2 {offsets = [5, 0], sizes = [1, 32], strides = [1, 1]} : vector<9x64xf32> to vector<1x32xf32>
    %9 = vector.extract_strided_slice %2 {offsets = [6, 0], sizes = [1, 32], strides = [1, 1]} : vector<9x64xf32> to vector<1x32xf32>
    %10 = vector.extract_strided_slice %2 {offsets = [7, 0], sizes = [1, 64], strides = [1, 1]} : vector<9x64xf32> to vector<1x64xf32>
    %11 = vector.extract_strided_slice %2 {offsets = [8, 0], sizes = [1, 32], strides = [1, 1]} : vector<9x64xf32> to vector<1x32xf32>
    %cst = arith.constant dense<0.000000e+00> : vector<16xf32>
    %12 = vector.multi_reduction <add>, %0, %cst [1] : vector<16x32xf32> to vector<16xf32>
    %13 = vector.shape_cast %12 : vector<16xf32> to vector<16x1xf32>
    %cst_5 = arith.constant 3.200000e+01 : f32
    %14 = vector.broadcast %cst_5 : f32 to vector<16x1xf32>
    %15 = arith.divf %13, %14 : vector<16x1xf32>
    %16 = vector.broadcast %15 : vector<16x1xf32> to vector<16x32xf32>
    %17 = arith.subf %0, %16 : vector<16x32xf32>
    %18 = arith.mulf %17, %17 : vector<16x32xf32>
    %cst_6 = arith.constant dense<0.000000e+00> : vector<16xf32>
    %19 = vector.multi_reduction <add>, %18, %cst_6 [1] : vector<16x32xf32> to vector<16xf32>
    %20 = vector.shape_cast %19 : vector<16xf32> to vector<16x1xf32>
    %cst_7 = arith.constant 3.200000e+01 : f32
    %21 = vector.broadcast %cst_7 : f32 to vector<16x1xf32>
    %22 = arith.divf %20, %21 : vector<16x1xf32>
    %23 = vector.broadcast %15 : vector<16x1xf32> to vector<16x32xf32>
    %24 = arith.subf %0, %23 : vector<16x32xf32>
    %cst_8 = arith.constant 9.99999974E-6 : f32
    %25 = vector.broadcast %cst_8 : f32 to vector<16x1xf32>
    %26 = arith.addf %22, %25 : vector<16x1xf32>
    %27 = math.rsqrt %26 : vector<16x1xf32>
    %28 = vector.broadcast %27 : vector<16x1xf32> to vector<16x32xf32>
    %29 = arith.mulf %24, %28 : vector<16x32xf32>
    %30 = vector.broadcast %3 : vector<1x32xf32> to vector<16x32xf32>
    %31 = arith.mulf %29, %30 : vector<16x32xf32>
    %32 = vector.broadcast %4 : vector<1x32xf32> to vector<16x32xf32>
    %33 = arith.addf %31, %32 : vector<16x32xf32>
    %c0_9 = arith.constant 0 : index
    %c0_10 = arith.constant 0 : index
    %34 = vector.load %arg3[%c0_9, %c0_10] : memref<32x64xf32, #tpu.memory_space<vmem>>, vector<32x64xf32>
    %cst_11 = arith.constant dense<0.000000e+00> : vector<16x64xf32>
    %35 = tpu.matmul %33, %34, %cst_11 {dimension_numbers = #tpu.dot_dimension_numbers<[1], [0], [0], [1], [0, 0, 1, 1], [], []>} : vector<16x32xf32>, vector<32x64xf32>, vector<16x64xf32> -> vector<16x64xf32>
    %36 = vector.broadcast %5 : vector<1x64xf32> to vector<16x64xf32>
    %37 = arith.addf %35, %36 : vector<16x64xf32>
    %c0_12 = arith.constant 0 : index
    %c0_13 = arith.constant 0 : index
    %38 = vector.load %arg4[%c0_12, %c0_13] : memref<32x64xf32, #tpu.memory_space<vmem>>, vector<32x64xf32>
    %cst_14 = arith.constant dense<0.000000e+00> : vector<24x64xf32>
    %39 = tpu.matmul %1, %38, %cst_14 {dimension_numbers = #tpu.dot_dimension_numbers<[1], [0], [0], [1], [0, 0, 1, 1], [], []>} : vector<24x32xf32>, vector<32x64xf32>, vector<24x64xf32> -> vector<24x64xf32>
    %40 = vector.broadcast %6 : vector<1x64xf32> to vector<24x64xf32>
    %41 = arith.addf %39, %40 : vector<24x64xf32>
    %42 = vector.shape_cast %37 : vector<16x64xf32> to vector<2x8x64xf32>
    %43 = vector.shape_cast %41 : vector<24x64xf32> to vector<2x12x64xf32>
    %44 = tpu.iota {dimensions = array<i32: 2>} : vector<1x1x64xi32>
    %cst_15 = arith.constant 0.000000e+00 : f32
    %45 = vector.broadcast %cst_15 : f32 to vector<2x8x64xf32>
    %c0_i32 = arith.constant 0 : i32
    %46 = vector.broadcast %c0_i32 : i32 to vector<1x1x64xi32>
    %47 = arith.cmpi sge, %44, %46 : vector<1x1x64xi32>
    %c8_i32 = arith.constant 8 : i32
    %48 = vector.broadcast %c8_i32 : i32 to vector<1x1x64xi32>
    %49 = arith.cmpi slt, %44, %48 : vector<1x1x64xi32>
    %50 = arith.andi %47, %49 : vector<1x1x64xi1>
    %51 = arith.extui %50 : vector<1x1x64xi1> to vector<1x1x64xi32>
    %52 = arith.sitofp %51 : vector<1x1x64xi32> to vector<1x1x64xf32>
    %c32_i32 = arith.constant 32 : i32
    %53 = vector.broadcast %c32_i32 : i32 to vector<1x1x64xi32>
    %54 = arith.cmpi sge, %44, %53 : vector<1x1x64xi32>
    %c40_i32 = arith.constant 40 : i32
    %55 = vector.broadcast %c40_i32 : i32 to vector<1x1x64xi32>
    %56 = arith.cmpi slt, %44, %55 : vector<1x1x64xi32>
    %57 = arith.andi %54, %56 : vector<1x1x64xi1>
    %58 = arith.extui %57 : vector<1x1x64xi1> to vector<1x1x64xi32>
    %59 = arith.sitofp %58 : vector<1x1x64xi32> to vector<1x1x64xf32>
    %60 = vector.broadcast %52 : vector<1x1x64xf32> to vector<2x8x64xf32>
    %61 = arith.mulf %42, %60 : vector<2x8x64xf32>
    "tpu.trace_start"() <{level = 10 : i32, message = "bqd,bkd->bqk"}> : () -> ()
    %cst_16 = arith.constant dense<0.000000e+00> : vector<2x8x12xf32>
    %62 = tpu.matmul %61, %43, %cst_16 {dimension_numbers = #tpu.dot_dimension_numbers<[2], [2], [1], [1], [0, 0, 0, 1, 1, 1], [0], [0]>} : vector<2x8x64xf32>, vector<2x12x64xf32>, vector<2x8x12xf32> -> vector<2x8x12xf32>
    "tpu.trace_stop"() : () -> ()
    %cst_17 = arith.constant 0.353553385 : f32
    %63 = vector.broadcast %cst_17 : f32 to vector<2x8x12xf32>
    %64 = arith.mulf %62, %63 : vector<2x8x12xf32>
    %cst_18 = arith.constant dense<0xFF800000> : vector<2x8xf32>
    %65 = vector.multi_reduction <maximumf>, %64, %cst_18 [2] : vector<2x8x12xf32> to vector<2x8xf32>
    %66 = vector.shape_cast %65 : vector<2x8xf32> to vector<2x8x1xf32>
    %67 = vector.broadcast %66 : vector<2x8x1xf32> to vector<2x8x12xf32>
    %68 = arith.subf %64, %67 : vector<2x8x12xf32>
    %69 = math.exp %68 : vector<2x8x12xf32>
    %cst_19 = arith.constant dense<0.000000e+00> : vector<2x8xf32>
    %70 = vector.multi_reduction <add>, %69, %cst_19 [2] : vector<2x8x12xf32> to vector<2x8xf32>
    %71 = vector.shape_cast %70 : vector<2x8xf32> to vector<2x8x1xf32>
    %72 = vector.broadcast %71 : vector<2x8x1xf32> to vector<2x8x12xf32>
    %73 = arith.divf %69, %72 : vector<2x8x12xf32>
    %74 = vector.broadcast %59 : vector<1x1x64xf32> to vector<2x12x64xf32>
    %75 = arith.mulf %43, %74 : vector<2x12x64xf32>
    "tpu.trace_start"() <{level = 10 : i32, message = "bqk,bkd->bqd"}> : () -> ()
    %cst_20 = arith.constant dense<0.000000e+00> : vector<2x8x64xf32>
    %76 = tpu.matmul %73, %75, %cst_20 {dimension_numbers = #tpu.dot_dimension_numbers<[2], [1], [1], [2], [0, 0, 0, 1, 1, 2], [0], [0]>} : vector<2x8x12xf32>, vector<2x12x64xf32>, vector<2x8x64xf32> -> vector<2x8x64xf32>
    "tpu.trace_stop"() : () -> ()
    %77 = arith.addf %45, %76 : vector<2x8x64xf32>
    %c8_i32_21 = arith.constant 8 : i32
    %78 = vector.broadcast %c8_i32_21 : i32 to vector<1x1x64xi32>
    %79 = arith.cmpi sge, %44, %78 : vector<1x1x64xi32>
    %c16_i32 = arith.constant 16 : i32
    %80 = vector.broadcast %c16_i32 : i32 to vector<1x1x64xi32>
    %81 = arith.cmpi slt, %44, %80 : vector<1x1x64xi32>
    %82 = arith.andi %79, %81 : vector<1x1x64xi1>
    %83 = arith.extui %82 : vector<1x1x64xi1> to vector<1x1x64xi32>
    %84 = arith.sitofp %83 : vector<1x1x64xi32> to vector<1x1x64xf32>
    %c40_i32_22 = arith.constant 40 : i32
    %85 = vector.broadcast %c40_i32_22 : i32 to vector<1x1x64xi32>
    %86 = arith.cmpi sge, %44, %85 : vector<1x1x64xi32>
    %c48_i32 = arith.constant 48 : i32
    %87 = vector.broadcast %c48_i32 : i32 to vector<1x1x64xi32>
    %88 = arith.cmpi slt, %44, %87 : vector<1x1x64xi32>
    %89 = arith.andi %86, %88 : vector<1x1x64xi1>
    %90 = arith.extui %89 : vector<1x1x64xi1> to vector<1x1x64xi32>
    %91 = arith.sitofp %90 : vector<1x1x64xi32> to vector<1x1x64xf32>
    %92 = vector.broadcast %84 : vector<1x1x64xf32> to vector<2x8x64xf32>
    %93 = arith.mulf %42, %92 : vector<2x8x64xf32>
    "tpu.trace_start"() <{level = 10 : i32, message = "bqd,bkd->bqk"}> : () -> ()
    %cst_23 = arith.constant dense<0.000000e+00> : vector<2x8x12xf32>
    %94 = tpu.matmul %93, %43, %cst_23 {dimension_numbers = #tpu.dot_dimension_numbers<[2], [2], [1], [1], [0, 0, 0, 1, 1, 1], [0], [0]>} : vector<2x8x64xf32>, vector<2x12x64xf32>, vector<2x8x12xf32> -> vector<2x8x12xf32>
    "tpu.trace_stop"() : () -> ()
    %cst_24 = arith.constant 0.353553385 : f32
    %95 = vector.broadcast %cst_24 : f32 to vector<2x8x12xf32>
    %96 = arith.mulf %94, %95 : vector<2x8x12xf32>
    %cst_25 = arith.constant dense<0xFF800000> : vector<2x8xf32>
    %97 = vector.multi_reduction <maximumf>, %96, %cst_25 [2] : vector<2x8x12xf32> to vector<2x8xf32>
    %98 = vector.shape_cast %97 : vector<2x8xf32> to vector<2x8x1xf32>
    %99 = vector.broadcast %98 : vector<2x8x1xf32> to vector<2x8x12xf32>
    %100 = arith.subf %96, %99 : vector<2x8x12xf32>
    %101 = math.exp %100 : vector<2x8x12xf32>
    %cst_26 = arith.constant dense<0.000000e+00> : vector<2x8xf32>
    %102 = vector.multi_reduction <add>, %101, %cst_26 [2] : vector<2x8x12xf32> to vector<2x8xf32>
    %103 = vector.shape_cast %102 : vector<2x8xf32> to vector<2x8x1xf32>
    %104 = vector.broadcast %103 : vector<2x8x1xf32> to vector<2x8x12xf32>
    %105 = arith.divf %101, %104 : vector<2x8x12xf32>
    %106 = vector.broadcast %91 : vector<1x1x64xf32> to vector<2x12x64xf32>
    %107 = arith.mulf %43, %106 : vector<2x12x64xf32>
    "tpu.trace_start"() <{level = 10 : i32, message = "bqk,bkd->bqd"}> : () -> ()
    %cst_27 = arith.constant dense<0.000000e+00> : vector<2x8x64xf32>
    %108 = tpu.matmul %105, %107, %cst_27 {dimension_numbers = #tpu.dot_dimension_numbers<[2], [1], [1], [2], [0, 0, 0, 1, 1, 2], [0], [0]>} : vector<2x8x12xf32>, vector<2x12x64xf32>, vector<2x8x64xf32> -> vector<2x8x64xf32>
    "tpu.trace_stop"() : () -> ()
    %109 = arith.addf %77, %108 : vector<2x8x64xf32>
    %c16_i32_28 = arith.constant 16 : i32
    %110 = vector.broadcast %c16_i32_28 : i32 to vector<1x1x64xi32>
    %111 = arith.cmpi sge, %44, %110 : vector<1x1x64xi32>
    %c24_i32 = arith.constant 24 : i32
    %112 = vector.broadcast %c24_i32 : i32 to vector<1x1x64xi32>
    %113 = arith.cmpi slt, %44, %112 : vector<1x1x64xi32>
    %114 = arith.andi %111, %113 : vector<1x1x64xi1>
    %115 = arith.extui %114 : vector<1x1x64xi1> to vector<1x1x64xi32>
    %116 = arith.sitofp %115 : vector<1x1x64xi32> to vector<1x1x64xf32>
    %c48_i32_29 = arith.constant 48 : i32
    %117 = vector.broadcast %c48_i32_29 : i32 to vector<1x1x64xi32>
    %118 = arith.cmpi sge, %44, %117 : vector<1x1x64xi32>
    %c56_i32 = arith.constant 56 : i32
    %119 = vector.broadcast %c56_i32 : i32 to vector<1x1x64xi32>
    %120 = arith.cmpi slt, %44, %119 : vector<1x1x64xi32>
    %121 = arith.andi %118, %120 : vector<1x1x64xi1>
    %122 = arith.extui %121 : vector<1x1x64xi1> to vector<1x1x64xi32>
    %123 = arith.sitofp %122 : vector<1x1x64xi32> to vector<1x1x64xf32>
    %124 = vector.broadcast %116 : vector<1x1x64xf32> to vector<2x8x64xf32>
    %125 = arith.mulf %42, %124 : vector<2x8x64xf32>
    "tpu.trace_start"() <{level = 10 : i32, message = "bqd,bkd->bqk"}> : () -> ()
    %cst_30 = arith.constant dense<0.000000e+00> : vector<2x8x12xf32>
    %126 = tpu.matmul %125, %43, %cst_30 {dimension_numbers = #tpu.dot_dimension_numbers<[2], [2], [1], [1], [0, 0, 0, 1, 1, 1], [0], [0]>} : vector<2x8x64xf32>, vector<2x12x64xf32>, vector<2x8x12xf32> -> vector<2x8x12xf32>
    "tpu.trace_stop"() : () -> ()
    %cst_31 = arith.constant 0.353553385 : f32
    %127 = vector.broadcast %cst_31 : f32 to vector<2x8x12xf32>
    %128 = arith.mulf %126, %127 : vector<2x8x12xf32>
    %cst_32 = arith.constant dense<0xFF800000> : vector<2x8xf32>
    %129 = vector.multi_reduction <maximumf>, %128, %cst_32 [2] : vector<2x8x12xf32> to vector<2x8xf32>
    %130 = vector.shape_cast %129 : vector<2x8xf32> to vector<2x8x1xf32>
    %131 = vector.broadcast %130 : vector<2x8x1xf32> to vector<2x8x12xf32>
    %132 = arith.subf %128, %131 : vector<2x8x12xf32>
    %133 = math.exp %132 : vector<2x8x12xf32>
    %cst_33 = arith.constant dense<0.000000e+00> : vector<2x8xf32>
    %134 = vector.multi_reduction <add>, %133, %cst_33 [2] : vector<2x8x12xf32> to vector<2x8xf32>
    %135 = vector.shape_cast %134 : vector<2x8xf32> to vector<2x8x1xf32>
    %136 = vector.broadcast %135 : vector<2x8x1xf32> to vector<2x8x12xf32>
    %137 = arith.divf %133, %136 : vector<2x8x12xf32>
    %138 = vector.broadcast %123 : vector<1x1x64xf32> to vector<2x12x64xf32>
    %139 = arith.mulf %43, %138 : vector<2x12x64xf32>
    "tpu.trace_start"() <{level = 10 : i32, message = "bqk,bkd->bqd"}> : () -> ()
    %cst_34 = arith.constant dense<0.000000e+00> : vector<2x8x64xf32>
    %140 = tpu.matmul %137, %139, %cst_34 {dimension_numbers = #tpu.dot_dimension_numbers<[2], [1], [1], [2], [0, 0, 0, 1, 1, 2], [0], [0]>} : vector<2x8x12xf32>, vector<2x12x64xf32>, vector<2x8x64xf32> -> vector<2x8x64xf32>
    "tpu.trace_stop"() : () -> ()
    %141 = arith.addf %109, %140 : vector<2x8x64xf32>
    %c24_i32_35 = arith.constant 24 : i32
    %142 = vector.broadcast %c24_i32_35 : i32 to vector<1x1x64xi32>
    %143 = arith.cmpi sge, %44, %142 : vector<1x1x64xi32>
    %c32_i32_36 = arith.constant 32 : i32
    %144 = vector.broadcast %c32_i32_36 : i32 to vector<1x1x64xi32>
    %145 = arith.cmpi slt, %44, %144 : vector<1x1x64xi32>
    %146 = arith.andi %143, %145 : vector<1x1x64xi1>
    %147 = arith.extui %146 : vector<1x1x64xi1> to vector<1x1x64xi32>
    %148 = arith.sitofp %147 : vector<1x1x64xi32> to vector<1x1x64xf32>
    %c56_i32_37 = arith.constant 56 : i32
    %149 = vector.broadcast %c56_i32_37 : i32 to vector<1x1x64xi32>
    %150 = arith.cmpi sge, %44, %149 : vector<1x1x64xi32>
    %c64_i32 = arith.constant 64 : i32
    %151 = vector.broadcast %c64_i32 : i32 to vector<1x1x64xi32>
    %152 = arith.cmpi slt, %44, %151 : vector<1x1x64xi32>
    %153 = arith.andi %150, %152 : vector<1x1x64xi1>
    %154 = arith.extui %153 : vector<1x1x64xi1> to vector<1x1x64xi32>
    %155 = arith.sitofp %154 : vector<1x1x64xi32> to vector<1x1x64xf32>
    %156 = vector.broadcast %148 : vector<1x1x64xf32> to vector<2x8x64xf32>
    %157 = arith.mulf %42, %156 : vector<2x8x64xf32>
    "tpu.trace_start"() <{level = 10 : i32, message = "bqd,bkd->bqk"}> : () -> ()
    %cst_38 = arith.constant dense<0.000000e+00> : vector<2x8x12xf32>
    %158 = tpu.matmul %157, %43, %cst_38 {dimension_numbers = #tpu.dot_dimension_numbers<[2], [2], [1], [1], [0, 0, 0, 1, 1, 1], [0], [0]>} : vector<2x8x64xf32>, vector<2x12x64xf32>, vector<2x8x12xf32> -> vector<2x8x12xf32>
    "tpu.trace_stop"() : () -> ()
    %cst_39 = arith.constant 0.353553385 : f32
    %159 = vector.broadcast %cst_39 : f32 to vector<2x8x12xf32>
    %160 = arith.mulf %158, %159 : vector<2x8x12xf32>
    %cst_40 = arith.constant dense<0xFF800000> : vector<2x8xf32>
    %161 = vector.multi_reduction <maximumf>, %160, %cst_40 [2] : vector<2x8x12xf32> to vector<2x8xf32>
    %162 = vector.shape_cast %161 : vector<2x8xf32> to vector<2x8x1xf32>
    %163 = vector.broadcast %162 : vector<2x8x1xf32> to vector<2x8x12xf32>
    %164 = arith.subf %160, %163 : vector<2x8x12xf32>
    %165 = math.exp %164 : vector<2x8x12xf32>
    %cst_41 = arith.constant dense<0.000000e+00> : vector<2x8xf32>
    %166 = vector.multi_reduction <add>, %165, %cst_41 [2] : vector<2x8x12xf32> to vector<2x8xf32>
    %167 = vector.shape_cast %166 : vector<2x8xf32> to vector<2x8x1xf32>
    %168 = vector.broadcast %167 : vector<2x8x1xf32> to vector<2x8x12xf32>
    %169 = arith.divf %165, %168 : vector<2x8x12xf32>
    %170 = vector.broadcast %155 : vector<1x1x64xf32> to vector<2x12x64xf32>
    %171 = arith.mulf %43, %170 : vector<2x12x64xf32>
    "tpu.trace_start"() <{level = 10 : i32, message = "bqk,bkd->bqd"}> : () -> ()
    %cst_42 = arith.constant dense<0.000000e+00> : vector<2x8x64xf32>
    %172 = tpu.matmul %169, %171, %cst_42 {dimension_numbers = #tpu.dot_dimension_numbers<[2], [1], [1], [2], [0, 0, 0, 1, 1, 2], [0], [0]>} : vector<2x8x12xf32>, vector<2x12x64xf32>, vector<2x8x64xf32> -> vector<2x8x64xf32>
    "tpu.trace_stop"() : () -> ()
    %173 = arith.addf %141, %172 : vector<2x8x64xf32>
    %174 = vector.shape_cast %173 : vector<2x8x64xf32> to vector<16x64xf32>
    %c0_43 = arith.constant 0 : index
    %c0_44 = arith.constant 0 : index
    %175 = vector.load %arg5[%c0_43, %c0_44] : memref<64x32xf32, #tpu.memory_space<vmem>>, vector<64x32xf32>
    %cst_45 = arith.constant dense<0.000000e+00> : vector<16x32xf32>
    %176 = tpu.matmul %174, %175, %cst_45 {dimension_numbers = #tpu.dot_dimension_numbers<[1], [0], [0], [1], [0, 0, 1, 1], [], []>} : vector<16x64xf32>, vector<64x32xf32>, vector<16x32xf32> -> vector<16x32xf32>
    %177 = vector.broadcast %7 : vector<1x32xf32> to vector<16x32xf32>
    %178 = arith.addf %176, %177 : vector<16x32xf32>
    %179 = arith.addf %0, %178 : vector<16x32xf32>
    %cst_46 = arith.constant dense<0.000000e+00> : vector<16xf32>
    %180 = vector.multi_reduction <add>, %179, %cst_46 [1] : vector<16x32xf32> to vector<16xf32>
    %181 = vector.shape_cast %180 : vector<16xf32> to vector<16x1xf32>
    %cst_47 = arith.constant 3.200000e+01 : f32
    %182 = vector.broadcast %cst_47 : f32 to vector<16x1xf32>
    %183 = arith.divf %181, %182 : vector<16x1xf32>
    %184 = vector.broadcast %183 : vector<16x1xf32> to vector<16x32xf32>
    %185 = arith.subf %179, %184 : vector<16x32xf32>
    %186 = arith.mulf %185, %185 : vector<16x32xf32>
    %cst_48 = arith.constant dense<0.000000e+00> : vector<16xf32>
    %187 = vector.multi_reduction <add>, %186, %cst_48 [1] : vector<16x32xf32> to vector<16xf32>
    %188 = vector.shape_cast %187 : vector<16xf32> to vector<16x1xf32>
    %cst_49 = arith.constant 3.200000e+01 : f32
    %189 = vector.broadcast %cst_49 : f32 to vector<16x1xf32>
    %190 = arith.divf %188, %189 : vector<16x1xf32>
    %191 = vector.broadcast %183 : vector<16x1xf32> to vector<16x32xf32>
    %192 = arith.subf %179, %191 : vector<16x32xf32>
    %cst_50 = arith.constant 9.99999974E-6 : f32
    %193 = vector.broadcast %cst_50 : f32 to vector<16x1xf32>
    %194 = arith.addf %190, %193 : vector<16x1xf32>
    %195 = math.rsqrt %194 : vector<16x1xf32>
    %196 = vector.broadcast %195 : vector<16x1xf32> to vector<16x32xf32>
    %197 = arith.mulf %192, %196 : vector<16x32xf32>
    %198 = vector.broadcast %3 : vector<1x32xf32> to vector<16x32xf32>
    %199 = arith.mulf %197, %198 : vector<16x32xf32>
    %200 = vector.broadcast %4 : vector<1x32xf32> to vector<16x32xf32>
    %201 = arith.addf %199, %200 : vector<16x32xf32>
    %c0_51 = arith.constant 0 : index
    %c0_52 = arith.constant 0 : index
    %202 = vector.load %arg6[%c0_51, %c0_52] : memref<32x64xf32, #tpu.memory_space<vmem>>, vector<32x64xf32>
    %cst_53 = arith.constant dense<0.000000e+00> : vector<16x64xf32>
    %203 = tpu.matmul %201, %202, %cst_53 {dimension_numbers = #tpu.dot_dimension_numbers<[1], [0], [0], [1], [0, 0, 1, 1], [], []>} : vector<16x32xf32>, vector<32x64xf32>, vector<16x64xf32> -> vector<16x64xf32>
    %204 = vector.broadcast %10 : vector<1x64xf32> to vector<16x64xf32>
    %205 = arith.addf %203, %204 : vector<16x64xf32>
    %cst_54 = arith.constant 0.000000e+00 : f32
    %206 = vector.broadcast %cst_54 : f32 to vector<16x64xf32>
    %207 = arith.maximumf %205, %206 : vector<16x64xf32>
    %c0_55 = arith.constant 0 : index
    %c0_56 = arith.constant 0 : index
    %208 = vector.load %arg7[%c0_55, %c0_56] : memref<64x32xf32, #tpu.memory_space<vmem>>, vector<64x32xf32>
    %cst_57 = arith.constant dense<0.000000e+00> : vector<16x32xf32>
    %209 = tpu.matmul %207, %208, %cst_57 {dimension_numbers = #tpu.dot_dimension_numbers<[1], [0], [0], [1], [0, 0, 1, 1], [], []>} : vector<16x64xf32>, vector<64x32xf32>, vector<16x32xf32> -> vector<16x32xf32>
    %210 = vector.broadcast %11 : vector<1x32xf32> to vector<16x32xf32>
    %211 = arith.addf %209, %210 : vector<16x32xf32>
    %212 = arith.addf %201, %211 : vector<16x32xf32>
    %cst_58 = arith.constant dense<0.000000e+00> : vector<16xf32>
    %213 = vector.multi_reduction <add>, %212, %cst_58 [1] : vector<16x32xf32> to vector<16xf32>
    %214 = vector.shape_cast %213 : vector<16xf32> to vector<16x1xf32>
    %cst_59 = arith.constant 3.200000e+01 : f32
    %215 = vector.broadcast %cst_59 : f32 to vector<16x1xf32>
    %216 = arith.divf %214, %215 : vector<16x1xf32>
    %217 = vector.broadcast %216 : vector<16x1xf32> to vector<16x32xf32>
    %218 = arith.subf %212, %217 : vector<16x32xf32>
    %219 = arith.mulf %218, %218 : vector<16x32xf32>
    %cst_60 = arith.constant dense<0.000000e+00> : vector<16xf32>
    %220 = vector.multi_reduction <add>, %219, %cst_60 [1] : vector<16x32xf32> to vector<16xf32>
    %221 = vector.shape_cast %220 : vector<16xf32> to vector<16x1xf32>
    %cst_61 = arith.constant 3.200000e+01 : f32
    %222 = vector.broadcast %cst_61 : f32 to vector<16x1xf32>
    %223 = arith.divf %221, %222 : vector<16x1xf32>
    %224 = vector.broadcast %216 : vector<16x1xf32> to vector<16x32xf32>
    %225 = arith.subf %212, %224 : vector<16x32xf32>
    %cst_62 = arith.constant 9.99999974E-6 : f32
    %226 = vector.broadcast %cst_62 : f32 to vector<16x1xf32>
    %227 = arith.addf %223, %226 : vector<16x1xf32>
    %228 = math.rsqrt %227 : vector<16x1xf32>
    %229 = vector.broadcast %228 : vector<16x1xf32> to vector<16x32xf32>
    %230 = arith.mulf %225, %229 : vector<16x32xf32>
    %231 = vector.broadcast %8 : vector<1x32xf32> to vector<16x32xf32>
    %232 = arith.mulf %230, %231 : vector<16x32xf32>
    %233 = vector.broadcast %9 : vector<1x32xf32> to vector<16x32xf32>
    %234 = arith.addf %232, %233 : vector<16x32xf32>
    %c0_63 = arith.constant 0 : index
    %c0_64 = arith.constant 0 : index
    %235 = vector.load %arg9[%c0_63, %c0_64] : memref<16x32xf32, #tpu.memory_space<vmem>>, vector<16x32xf32>
    tpu.vector_store %arg9[%c0_63, %c0_64], %234 {strides = array<i32>} : memref<16x32xf32, #tpu.memory_space<vmem>>, vector<16x32xf32>,
    return
  }
  func.func @transform_0(%arg0: i32) -> (i32, i32) {
    %c0_i32 = arith.constant 0 : i32
    %c0_i32_0 = arith.constant 0 : i32
    %c0_i32_1 = arith.constant 0 : i32
    return %c0_i32, %c0_i32_0 : i32, i32
  }
  func.func @transform_1(%arg0: i32) -> (i32, i32) {
    %c0_i32 = arith.constant 0 : i32
    %c0_i32_0 = arith.constant 0 : i32
    %c0_i32_1 = arith.constant 0 : i32
    return %c0_i32, %c0_i32_0 : i32, i32
  }
  func.func @transform_2(%arg0: i32) -> (i32, i32) {
    %c0_i32 = arith.constant 0 : i32
    %c0_i32_0 = arith.constant 0 : i32
    %c0_i32_1 = arith.constant 0 : i32
    return %c0_i32, %c0_i32_0 : i32, i32
  }
  func.func @transform_3(%arg0: i32) -> (i32, i32) {
    %c0_i32 = arith.constant 0 : i32
    %c0_i32_0 = arith.constant 0 : i32
    %c0_i32_1 = arith.constant 0 : i32
    return %c0_i32, %c0_i32_0 : i32, i32
  }
  func.func @transform_4(%arg0: i32) -> (i32, i32) {
    %c0_i32 = arith.constant 0 : i32
    %c0_i32_0 = arith.constant 0 : i32
    %c0_i32_1 = arith.constant 0 : i32
    return %c0_i32, %c0_i32_0 : i32, i32
  }
  func.func @transform_5(%arg0: i32) -> (i32, i32) {
    %c0_i32 = arith.constant 0 : i32
    %c0_i32_0 = arith.constant 0 : i32
    %c0_i32_1 = arith.constant 0 : i32
    return %c0_i32, %c0_i32_0 : i32, i32
  }
  func.func @transform_6(%arg0: i32) -> (i32, i32) {
    %c0_i32 = arith.constant 0 : i32
    %c0_i32_0 = arith.constant 0 : i32
    %c0_i32_1 = arith.constant 0 : i32
    return %c0_i32, %c0_i32_0 : i32, i32
  }
  func.func @transform_7(%arg0: i32) -> (i32, i32) {
    %c0_i32 = arith.constant 0 : i32
    %c0_i32_0 = arith.constant 0 : i32
    %c0_i32_1 = arith.constant 0 : i32
    return %c0_i32, %c0_i32_0 : i32, i32
  }
  func.func @transform_8(%arg0: i32) -> (i32, i32) {
    %c0_i32 = arith.constant 0 : i32
    %c0_i32_0 = arith.constant 0 : i32
    %c0_i32_1 = arith.constant 0 : i32
    return %c0_i32, %c0_i32_0 : i32, i32
  }
}

</mosaic_0001>

<llo_original>
// kernel: tpu_custom_call.1
$region0: #{tpu_custom_call.1}
  #allocation0 [shape = 'u32[]', space=smem, size = 0x4, offset = 0x4, fixed_abs, tag = 'smem constant byte address 0x4 - core index']
  #allocation1 [shape = 'u32[72,128]{1,0:T(1,128)}', space=vmem, size = 0x9000, scoped, tag = 'internal scratch']
  %s0 = inlined_call_operand.vmem [shape: f32[16,32], index: 0, kind: input, shape index: {}]
  %s1 = inlined_call_operand.vmem [shape: f32[24,32], index: 1, kind: input, shape index: {}]
  %s2 = inlined_call_operand.vmem [shape: f32[32,64], index: 2, kind: input, shape index: {}]
  %s3 = inlined_call_operand.vmem [shape: f32[32,64], index: 3, kind: input, shape index: {}]
  %s4 = inlined_call_operand.vmem [shape: f32[64,32], index: 4, kind: input, shape index: {}]
  %s5 = inlined_call_operand.vmem [shape: f32[32,64], index: 5, kind: input, shape index: {}]
  %s6 = inlined_call_operand.vmem [shape: f32[64,32], index: 6, kind: input, shape index: {}]
  %s7 = inlined_call_operand.vmem [shape: f32[9,64], index: 7, kind: input, shape index: {}]
  %s8 = inlined_call_operand.hbm [shape: f32[16,32], index: 8, kind: output, shape index: {}]
  %s9 = sld [smem:[#allocation0]]
  $region42: #{tpu_custom_call.1} parent=0
    _
  %s11 = ssub.s32 1, %s9
  %s12 = scalar_select 0, %s11, %s9
  $region1: #{tpu_custom_call.1} parent=0
    #allocation2 [shape = 'u8[8192]{0}', space=vmem, size = 0x2000, scoped, tag = 'output window, operand 0, single buffered']
    #allocation3 [shape = 's32[1]{0}', space=sflag, size = 0x4, scoped, tag = 'scoped memory for tpu_custom_call.1']
    %13 = vsyncpa [#allocation3], 0
    // Predicated region
    $region2: #{tpu_custom_call.1} parent=1 // pred_check
      _
    $region3: #{tpu_custom_call.1} parent=1 // pred_check_branch
      %15 = sbr.rel (0) target = $region5
    $region4: #{tpu_custom_call.1} parent=1 // pred_region
      _
    $region5: #{tpu_custom_call.1} parent=1 // pred_fallthru
      _
    // Predicated region
    $region6: #{tpu_custom_call.1} parent=1 // pred_check
      _
    $region7: #{tpu_custom_call.1} parent=1 // pred_check_branch
      %17 = sbr.rel (0) target = $region9
    $region8: #{tpu_custom_call.1} parent=1 // pred_region
      _
    $region9: #{tpu_custom_call.1} parent=1 // pred_fallthru
      _
    // Predicated region
    $region10: #{tpu_custom_call.1} parent=1 // pred_check
      _
    $region11: #{tpu_custom_call.1} parent=1 // pred_check_branch
      %19 = sbr.rel (0) target = $region13
    $region12: #{tpu_custom_call.1} parent=1 // pred_region
      _
    $region13: #{tpu_custom_call.1} parent=1 // pred_fallthru
      _
    // Predicated region
    $region14: #{tpu_custom_call.1} parent=1 // pred_check
      _
    $region15: #{tpu_custom_call.1} parent=1 // pred_check_branch
      %21 = sbr.rel (0) target = $region17
    $region16: #{tpu_custom_call.1} parent=1 // pred_region
      _
    $region17: #{tpu_custom_call.1} parent=1 // pred_fallthru
      _
    // Predicated region
    $region18: #{tpu_custom_call.1} parent=1 // pred_check
      _
    $region19: #{tpu_custom_call.1} parent=1 // pred_check_branch
      %23 = sbr.rel (0) target = $region21
    $region20: #{tpu_custom_call.1} parent=1 // pred_region
      _
    $region21: #{tpu_custom_call.1} parent=1 // pred_fallthru
      _
    // Predicated region
    $region22: #{tpu_custom_call.1} parent=1 // pred_check
      _
    $region23: #{tpu_custom_call.1} parent=1 // pred_check_branch
      %25 = sbr.rel (0) target = $region25
    $region24: #{tpu_custom_call.1} parent=1 // pred_region
      _
    $region25: #{tpu_custom_call.1} parent=1 // pred_fallthru
      _
    // Predicated region
    $region26: #{tpu_custom_call.1} parent=1 // pred_check
      _
    $region27: #{tpu_custom_call.1} parent=1 // pred_check_branch
      %27 = sbr.rel (0) target = $region29
    $region28: #{tpu_custom_call.1} parent=1 // pred_region
      _
    $region29: #{tpu_custom_call.1} parent=1 // pred_fallthru
      _
    // Predicated region
    $region30: #{tpu_custom_call.1} parent=1 // pred_check
      _
    $region31: #{tpu_custom_call.1} parent=1 // pred_check_branch
      %29 = sbr.rel (0) target = $region33
    $region32: #{tpu_custom_call.1} parent=1 // pred_region
      _
    $region33: #{tpu_custom_call.1} parent=1 // pred_fallthru
      _
    %v30 = vld [vmem:[%s0] sm:$0xff]
    %v31 = vld [vmem:[%s0 + $0x8] sm:$0xff]
    %v32 = vld [vmem:[%s1] sm:$0xff]
    %v33 = vld [vmem:[%s1 + $0x8] sm:$0xff]
    %v34 = vld [vmem:[%s1 + $0x10] sm:$0xff]
    %v35 = vld [vmem:[%s7] sm:$0xff]
    %v36 = vld [vmem:[%s7 + $0x8] sm:$0x1]
    %vm37 = vcmask 261120
    %v38 = vsel %vm37, %v30, 0.0
    %39 = vadd.xlane.f32.xlu0 %v38
    %v40 = vpop.xlane.xlu0 %39
    %v41 = vsel %vm37, %v31, 0.0
    %42 = vadd.xlane.f32.xlu0 %v41
    %v43 = vpop.xlane.xlu0 %42
    %v44 = vrcp.pop 32.0
    %v45 = vmul.f32 32.0, %v44
    %v46 = vsub.f32 1.0, %v45
    %v47 = vmul.f32 %v44, %v46
    %v48 = vadd.f32 %v44, %v47
    %vm49 = vweird.f32 %v44
    %v50 = vsel %vm49, %v44, %v48
    %v51 = vmul.f32 %v40, %v50
    %v52 = vmul.f32 %v43, %v50
    %v53 = vsub.f32 %v30, %v51
    %v54 = vsub.f32 %v31, %v52
    %v55 = vmul.f32 %v53, %v53
    %v56 = vmul.f32 %v54, %v54
    %v57 = vsel %vm37, %v55, 0.0
    %58 = vadd.xlane.f32.xlu0 %v57
    %v59 = vpop.xlane.xlu0 %58
    %v60 = vsel %vm37, %v56, 0.0
    %61 = vadd.xlane.f32.xlu0 %v60
    %v62 = vpop.xlane.xlu0 %61
    %v63 = vmul.f32 %v59, %v50
    %v64 = vmul.f32 %v62, %v50
    %v65 = vadd.f32 %v63, 1e-05
    %v66 = vadd.f32 %v64, 1e-05
    %v67 = vrsqrt.pop %v65
    %v68 = vmul.f32 %v67, %v65
    %v69 = vmul.f32 %v68, %v67
    %v70 = vmul.f32 0.5, %v69
    %v71 = vsub.f32 1.5, %v70
    %v72 = vmul.f32 %v67, %v71
    %vm73 = vweird.f32 %v65
    %vm74 = vweird.f32 %v67
    %vm75 = vmor %vm73, %vm74
    %v76 = vsel %vm75, %v67, %v72
    %v77 = vrsqrt.pop %v66
    %v78 = vmul.f32 %v77, %v66
    %v79 = vmul.f32 %v78, %v77
    %v80 = vmul.f32 0.5, %v79
    %v81 = vsub.f32 1.5, %v80
    %v82 = vmul.f32 %v77, %v81
    %vm83 = vweird.f32 %v66
    %vm84 = vweird.f32 %v77
    %vm85 = vmor %vm83, %vm84
    %v86 = vsel %vm85, %v77, %v82
    %v87 = vmul.f32 %v53, %v76
    %v88 = vmul.f32 %v54, %v86
    %v89 = vperm.slane %v35, 0
    %v90 = vmul.f32 %v87, %v89
    %v91 = vmul.f32 %v88, %v89
    %v92 = vperm.slane %v35, 1
    %v93 = vadd.f32 %v90, %v92
    %v94 = vadd.f32 %v91, %v92
    %v95 = vld [vmem:[%s2] sm:$0xff]
    %v96 = vld [vmem:[%s2 + $0x8] sm:$0xff]
    %v97 = vld [vmem:[%s2 + $0x10] sm:$0xff]
    %v98 = vld [vmem:[%s2 + $0x18] sm:$0xff]
    %v99 = vperm.slane %v35, 2
    %v101 = vsel %vm37, %v93, 0
    %v104 = vsel %vm37, %v94, 0
    %106 = vmatpush.msra.mxu0 0.0
    %107 = vmatpush.msra.mxu0 0.0
    %108 = vmatpush.msra.mxu0 0.0
    %109 = vmatpush.msra.mxu0 0.0
    %110 = vmatpush.msra.mxu0 0.0
    %111 = vmatpush.msra.mxu0 0.0
    %112 = vmatpush.msra.mxu0 0.0
    %113 = vmatpush.msra.mxu0 0.0
    %114 = vmatpush.msra.mxu0 0.0
    %115 = vmatpush.msra.mxu0 0.0
    %116 = vmatpush.msra.mxu0 0.0
    %117 = vmatpush.msra.mxu0 0.0
    %118 = vmatpush.msra.mxu0 %v98
    %119 = vmatpush.msra.mxu0 %v97
    %120 = vmatpush.msra.mxu0 %v96
    %121 = vmatpush.msra.mxu0 %v95
    %122 = vmatmul.f32.gmra.mxu0 %v101
    %v123 = vpop.f32.mrf.mxu0
    %v124 = vadd.f32 %v99, %v123
    %125 = vmatmul.f32.gmra.mxu0 %v104
    %v126 = vpop.f32.mrf.mxu0
    %v127 = vadd.f32 %v99, %v126
    %128 = vdwg.mxu0
    %v129 = vld [vmem:[%s3] sm:$0xff]
    %v130 = vld [vmem:[%s3 + $0x8] sm:$0xff]
    %v131 = vld [vmem:[%s3 + $0x10] sm:$0xff]
    %v132 = vld [vmem:[%s3 + $0x18] sm:$0xff]
    %v133 = vperm.slane %v35, 3
    %v135 = vsel %vm37, %v32, 0
    %v138 = vsel %vm37, %v33, 0
    %v141 = vsel %vm37, %v34, 0
    %143 = vmatpush.msra.mxu0 0.0
    %144 = vmatpush.msra.mxu0 0.0
    %145 = vmatpush.msra.mxu0 0.0
    %146 = vmatpush.msra.mxu0 0.0
    %147 = vmatpush.msra.mxu0 0.0
    %148 = vmatpush.msra.mxu0 0.0
    %149 = vmatpush.msra.mxu0 0.0
    %150 = vmatpush.msra.mxu0 0.0
    %151 = vmatpush.msra.mxu0 0.0
    %152 = vmatpush.msra.mxu0 0.0
    %153 = vmatpush.msra.mxu0 0.0
    %154 = vmatpush.msra.mxu0 0.0
    %155 = vmatpush.msra.mxu0 %v132
    %156 = vmatpush.msra.mxu0 %v131
    %157 = vmatpush.msra.mxu0 %v130
    %158 = vmatpush.msra.mxu0 %v129
    %159 = vmatmul.f32.gmra.mxu0 %v135
    %v160 = vpop.f32.mrf.mxu0
    %v161 = vadd.f32 %v133, %v160
    %162 = vmatmul.f32.gmra.mxu0 %v138
    %v163 = vpop.f32.mrf.mxu0
    %v164 = vadd.f32 %v133, %v163
    %165 = vmatmul.f32.gmra.mxu0 %v141
    %v166 = vpop.f32.mrf.mxu0
    %v167 = vadd.f32 %v133, %v166
    %168 = vdwg.mxu0
    %v172 = vrot.slane %v161, 4
    %v173 = vrot.slane %v164, 4
    %v174 = vrot.slane %v167, 4
    %v178 = vlaneseq
    %v179 = vand.u32 %v178, 127
    %vm180 = vcmp.ge.s32.totalorder %v179, 0
    %vm181 = vcmp.lt.s32.totalorder %v179, 8
    %vm182 = vmand %vm180, %vm181
    %v183 = vsel %vm182, 1, 0
    %v184 = vcvt.s32.f32 %v183
    %vm185 = vcmp.ge.s32.totalorder %v179, 32
    %vm186 = vcmp.lt.s32.totalorder %v179, 40
    %vm187 = vmand %vm185, %vm186
    %v188 = vsel %vm187, 1, 0
    %v189 = vcvt.s32.f32 %v188
    %v190 = vmul.f32 %v124, %v184
    %v191 = vmul.f32 %v127, %v184
    %192 = vst [vmem:[#allocation1] ss:$2 sm:$0xff] %v161
    %s193 = scalar_lea.vmem [#allocation1], 1
    %194 = vst [vmem:[%s193] ss:$2 sm:$0xff] %v172
    %s195 = scalar_lea.vmem [#allocation1], 16
    %196 = vst [vmem:[%s195] ss:$2 sm:$0xff] %v164
    %v197 = vld.sshfl [vmem:[#allocation1] sm:$0xff pattern:$0x75316420]
    %v198 = vld.sshfl [vmem:[#allocation1 + $0x10] sm:$0xff pattern:$0x75316420]
    %vm199 = vcmask 523264
    %v201 = vsel %vm199, %v190, 0
    %v203 = vsel %vm199, %v197, 0
    %v205 = vsel %vm199, %v198, 0
    %207 = vmatpush.xpose.msra.mxu0 0.0
    %208 = vmatpush.xpose.msra.mxu0 0.0
    %209 = vmatpush.xpose.msra.mxu0 0.0
    %210 = vmatpush.xpose.msra.mxu0 0.0
    %211 = vmatpush.xpose.msra.mxu0 0.0
    %212 = vmatpush.xpose.msra.mxu0 0.0
    %213 = vmatpush.xpose.msra.mxu0 0.0
    %214 = vmatpush.xpose.msra.mxu0 0.0
    %215 = vmatpush.xpose.msra.mxu0 0.0
    %216 = vmatpush.xpose.msra.mxu0 0.0
    %217 = vmatpush.xpose.msra.mxu0 0.0
    %218 = vmatpush.xpose.msra.mxu0 0.0
    %219 = vmatpush.xpose.msra.mxu0 0.0
    %220 = vmatpush.xpose.msra.mxu0 0.0
    %221 = vmatpush.xpose.msra.mxu0 %v205
    %222 = vmatpush.xpose.msra.mxu0 %v203
    %223 = vmatmul.f32.gmra.mxu0 %v201
    %v224 = vpop.f32.mrf.mxu0
    %v225 = vadd.f32 0.0, %v224
    %226 = vdwg.mxu0
    %227 = vst [vmem:[#allocation1] ss:$2 sm:$0xff] %v173
    %s228 = scalar_lea.vmem [#allocation1], 1
    %229 = vst [vmem:[%s228] ss:$2 sm:$0xff] %v167
    %s230 = scalar_lea.vmem [#allocation1], 16
    %231 = vst [vmem:[%s230] ss:$2 sm:$0xff] %v174
    %v232 = vld.sshfl [vmem:[#allocation1] sm:$0xff pattern:$0x75316420]
    %v233 = vld.sshfl [vmem:[#allocation1 + $0x10] sm:$0xff pattern:$0x75316420]
    %v235 = vsel %vm199, %v191, 0
    %v237 = vsel %vm199, %v232, 0
    %v239 = vsel %vm199, %v233, 0
    %241 = vmatpush.xpose.msra.mxu0 0.0
    %242 = vmatpush.xpose.msra.mxu0 0.0
    %243 = vmatpush.xpose.msra.mxu0 0.0
    %244 = vmatpush.xpose.msra.mxu0 0.0
    %245 = vmatpush.xpose.msra.mxu0 0.0
    %246 = vmatpush.xpose.msra.mxu0 0.0
    %247 = vmatpush.xpose.msra.mxu0 0.0
    %248 = vmatpush.xpose.msra.mxu0 0.0
    %249 = vmatpush.xpose.msra.mxu0 0.0
    %250 = vmatpush.xpose.msra.mxu0 0.0
    %251 = vmatpush.xpose.msra.mxu0 0.0
    %252 = vmatpush.xpose.msra.mxu0 0.0
    %253 = vmatpush.xpose.msra.mxu0 0.0
    %254 = vmatpush.xpose.msra.mxu0 0.0
    %255 = vmatpush.xpose.msra.mxu0 %v239
    %256 = vmatpush.xpose.msra.mxu0 %v237
    %257 = vmatmul.f32.gmra.mxu0 %v235
    %v258 = vpop.f32.mrf.mxu0
    %v259 = vadd.f32 0.0, %v258
    %260 = vdwg.mxu0
    %v261 = vmul.f32 %v225, 0.35355338
    %v262 = vmul.f32 %v259, 0.35355338
    %vm263 = vcmask 97280
    %v264 = vsel %vm263, %v261, -inf
    %265 = vmax.xlane.f32.xlu0 %v264
    %v266 = vpop.xlane.xlu0 %265
    %v267 = vsel %vm263, %v262, -inf
    %268 = vmax.xlane.f32.xlu0 %v267
    %v269 = vpop.xlane.xlu0 %268
    %v270 = vsub.f32 %v261, %v266
    %v271 = vsub.f32 %v262, %v269
    %v272 = vmul.f32 %v270, 1.442695
    %v273 = vpow.pop %v272
    %v274 = vmul.f32 %v271, 1.442695
    %v275 = vpow.pop %v274
    %v276 = vsel %vm263, %v273, 0.0
    %277 = vadd.xlane.f32.xlu0 %v276
    %v278 = vpop.xlane.xlu0 %277
    %v279 = vsel %vm263, %v275, 0.0
    %280 = vadd.xlane.f32.xlu0 %v279
    %v281 = vpop.xlane.xlu0 %280
    %v282 = vrcp.pop %v278
    %v283 = vmul.f32 %v278, %v282
    %v284 = vsub.f32 1.0, %v283
    %v285 = vmul.f32 %v282, %v284
    %v286 = vadd.f32 %v282, %v285
    %vm287 = vweird.f32 %v278
    %vm288 = vweird.f32 %v282
    %vm289 = vmor %vm287, %vm288
    %v290 = vsel %vm289, %v282, %v286
    %v291 = vand.u32 2147483647, %v278
    %vm292 = vcmp.eq.f32.partialorder %v291, 8.507059e+37
    %v293 = vand.u32 %v278, 2147483648
    %v294 = vor.u32 1.1754944e-38, %v293
    %v295 = vsel %vm292, %v294, %v290
    %v296 = vmul.f32 %v273, %v295
    %v297 = vrcp.pop %v281
    %v298 = vmul.f32 %v281, %v297
    %v299 = vsub.f32 1.0, %v298
    %v300 = vmul.f32 %v297, %v299
    %v301 = vadd.f32 %v297, %v300
    %vm302 = vweird.f32 %v281
    %vm303 = vweird.f32 %v297
    %vm304 = vmor %vm302, %vm303
    %v305 = vsel %vm304, %v297, %v301
    %v306 = vand.u32 2147483647, %v281
    %vm307 = vcmp.eq.f32.partialorder %v306, 8.507059e+37
    %v308 = vand.u32 %v281, 2147483648
    %v309 = vor.u32 1.1754944e-38, %v308
    %v310 = vsel %vm307, %v309, %v305
    %v311 = vmul.f32 %v275, %v310
    %v313 = vrot.slane %v189, 4
    %v315 = vmul.f32 %v161, %v189
    %v316 = vmul.f32 %v172, %v313
    %v317 = vmul.f32 %v164, %v189
    %v318 = vmul.f32 %v173, %v189
    %v319 = vmul.f32 %v167, %v313
    %v320 = vmul.f32 %v174, %v189
    %vm321 = vcmp.ge.s32.totalorder %v179, 8
    %vm322 = vcmp.lt.s32.totalorder %v179, 16
    %vm323 = vmand %vm321, %vm322
    %v324 = vsel %vm323, 1, 0
    %v325 = vcvt.s32.f32 %v324
    %vm326 = vcmp.ge.s32.totalorder %v179, 40
    %vm327 = vcmp.lt.s32.totalorder %v179, 48
    %vm328 = vmand %vm326, %vm327
    %v329 = vsel %vm328, 1, 0
    %v330 = vcvt.s32.f32 %v329
    %v331 = vmul.f32 %v124, %v325
    %v332 = vmul.f32 %v127, %v325
    %333 = vst [vmem:[#allocation1] ss:$2 sm:$0xff] %v161
    %s334 = scalar_lea.vmem [#allocation1], 1
    %335 = vst [vmem:[%s334] ss:$2 sm:$0xff] %v172
    %s336 = scalar_lea.vmem [#allocation1], 16
    %337 = vst [vmem:[%s336] ss:$2 sm:$0xff] %v164
    %v338 = vld.sshfl [vmem:[#allocation1] sm:$0xff pattern:$0x75316420]
    %v339 = vld.sshfl [vmem:[#allocation1 + $0x10] sm:$0xff pattern:$0x75316420]
    %v341 = vsel %vm199, %v331, 0
    %v343 = vsel %vm199, %v338, 0
    %v345 = vsel %vm199, %v339, 0
    %347 = vmatpush.xpose.msra.mxu0 0.0
    %348 = vmatpush.xpose.msra.mxu0 0.0
    %349 = vmatpush.xpose.msra.mxu0 0.0
    %350 = vmatpush.xpose.msra.mxu0 0.0
    %351 = vmatpush.xpose.msra.mxu0 0.0
    %352 = vmatpush.xpose.msra.mxu0 0.0
    %353 = vmatpush.xpose.msra.mxu0 0.0
    %354 = vmatpush.xpose.msra.mxu0 0.0
    %355 = vmatpush.xpose.msra.mxu0 0.0
    %356 = vmatpush.xpose.msra.mxu0 0.0
    %357 = vmatpush.xpose.msra.mxu0 0.0
    %358 = vmatpush.xpose.msra.mxu0 0.0
    %359 = vmatpush.xpose.msra.mxu0 0.0
    %360 = vmatpush.xpose.msra.mxu0 0.0
    %361 = vmatpush.xpose.msra.mxu0 %v345
    %362 = vmatpush.xpose.msra.mxu0 %v343
    %363 = vmatmul.f32.gmra.mxu0 %v341
    %v364 = vpop.f32.mrf.mxu0
    %v365 = vadd.f32 0.0, %v364
    %366 = vdwg.mxu0
    %367 = vst [vmem:[#allocation1] ss:$2 sm:$0xff] %v173
    %s368 = scalar_lea.vmem [#allocation1], 1
    %369 = vst [vmem:[%s368] ss:$2 sm:$0xff] %v167
    %s370 = scalar_lea.vmem [#allocation1], 16
    %371 = vst [vmem:[%s370] ss:$2 sm:$0xff] %v174
    %v372 = vld.sshfl [vmem:[#allocation1] sm:$0xff pattern:$0x75316420]
    %v373 = vld.sshfl [vmem:[#allocation1 + $0x10] sm:$0xff pattern:$0x75316420]
    %v375 = vsel %vm199, %v332, 0
    %v377 = vsel %vm199, %v372, 0
    %v379 = vsel %vm199, %v373, 0
    %381 = vmatpush.xpose.msra.mxu0 0.0
    %382 = vmatpush.xpose.msra.mxu0 0.0
    %383 = vmatpush.xpose.msra.mxu0 0.0
    %384 = vmatpush.xpose.msra.mxu0 0.0
    %385 = vmatpush.xpose.msra.mxu0 0.0
    %386 = vmatpush.xpose.msra.mxu0 0.0
    %387 = vmatpush.xpose.msra.mxu0 0.0
    %388 = vmatpush.xpose.msra.mxu0 0.0
    %389 = vmatpush.xpose.msra.mxu0 0.0
    %390 = vmatpush.xpose.msra.mxu0 0.0
    %391 = vmatpush.xpose.msra.mxu0 0.0
    %392 = vmatpush.xpose.msra.mxu0 0.0
    %393 = vmatpush.xpose.msra.mxu0 0.0
    %394 = vmatpush.xpose.msra.mxu0 0.0
    %395 = vmatpush.xpose.msra.mxu0 %v379
    %396 = vmatpush.xpose.msra.mxu0 %v377
    %397 = vmatmul.f32.gmra.mxu0 %v375
    %v398 = vpop.f32.mrf.mxu0
    %v399 = vadd.f32 0.0, %v398
    %400 = vdwg.mxu0
    %v401 = vmul.f32 %v365, 0.35355338
    %v402 = vmul.f32 %v399, 0.35355338
    %v403 = vsel %vm263, %v401, -inf
    %404 = vmax.xlane.f32.xlu0 %v403
    %v405 = vpop.xlane.xlu0 %404
    %v406 = vsel %vm263, %v402, -inf
    %407 = vmax.xlane.f32.xlu0 %v406
    %v408 = vpop.xlane.xlu0 %407
    %v409 = vsub.f32 %v401, %v405
    %v410 = vsub.f32 %v402, %v408
    %v411 = vmul.f32 %v409, 1.442695
    %v412 = vpow.pop %v411
    %v413 = vmul.f32 %v410, 1.442695
    %v414 = vpow.pop %v413
    %v415 = vsel %vm263, %v412, 0.0
    %416 = vadd.xlane.f32.xlu0 %v415
    %v417 = vpop.xlane.xlu0 %416
    %v418 = vsel %vm263, %v414, 0.0
    %419 = vadd.xlane.f32.xlu0 %v418
    %v420 = vpop.xlane.xlu0 %419
    %v421 = vrcp.pop %v417
    %v422 = vmul.f32 %v417, %v421
    %v423 = vsub.f32 1.0, %v422
    %v424 = vmul.f32 %v421, %v423
    %v425 = vadd.f32 %v421, %v424
    %vm426 = vweird.f32 %v417
    %vm427 = vweird.f32 %v421
    %vm428 = vmor %vm426, %vm427
    %v429 = vsel %vm428, %v421, %v425
    %v430 = vand.u32 2147483647, %v417
    %vm431 = vcmp.eq.f32.partialorder %v430, 8.507059e+37
    %v432 = vand.u32 %v417, 2147483648
    %v433 = vor.u32 1.1754944e-38, %v432
    %v434 = vsel %vm431, %v433, %v429
    %v435 = vmul.f32 %v412, %v434
    %v436 = vrcp.pop %v420
    %v437 = vmul.f32 %v420, %v436
    %v438 = vsub.f32 1.0, %v437
    %v439 = vmul.f32 %v436, %v438
    %v440 = vadd.f32 %v436, %v439
    %vm441 = vweird.f32 %v420
    %vm442 = vweird.f32 %v436
    %vm443 = vmor %vm441, %vm442
    %v444 = vsel %vm443, %v436, %v440
    %v445 = vand.u32 2147483647, %v420
    %vm446 = vcmp.eq.f32.partialorder %v445, 8.507059e+37
    %v447 = vand.u32 %v420, 2147483648
    %v448 = vor.u32 1.1754944e-38, %v447
    %v449 = vsel %vm446, %v448, %v444
    %v450 = vmul.f32 %v414, %v449
    %v452 = vrot.slane %v330, 4
    %v454 = vmul.f32 %v161, %v330
    %v455 = vmul.f32 %v172, %v452
    %v456 = vmul.f32 %v164, %v330
    %v457 = vmul.f32 %v173, %v330
    %v458 = vmul.f32 %v167, %v452
    %v459 = vmul.f32 %v174, %v330
    %463 = vst [vmem:[#allocation1] ss:$2 sm:$0xff] %v454
    %s464 = scalar_lea.vmem [#allocation1], 1
    %465 = vst [vmem:[%s464] ss:$2 sm:$0xff] %v455
    %s466 = scalar_lea.vmem [#allocation1], 16
    %467 = vst [vmem:[%s466] ss:$2 sm:$0xff] %v456
    %v468 = vld.sshfl [vmem:[#allocation1] sm:$0xff pattern:$0x75316420]
    %v469 = vld.sshfl [vmem:[#allocation1 + $0x10] sm:$0xff pattern:$0x75316420]
    %v472 = vsel %vm263, %v435, 0
    %vm474 = vcmask 1043456
    %v475 = vsel %vm474, %v469, 0
    %477 = vmatpush.msra.mxu0 0.0
    %478 = vmatpush.msra.mxu0 0.0
    %479 = vmatpush.msra.mxu0 0.0
    %480 = vmatpush.msra.mxu0 0.0
    %481 = vmatpush.msra.mxu0 0.0
    %482 = vmatpush.msra.mxu0 0.0
    %483 = vmatpush.msra.mxu0 0.0
    %484 = vmatpush.msra.mxu0 0.0
    %485 = vmatpush.msra.mxu0 0.0
    %486 = vmatpush.msra.mxu0 0.0
    %487 = vmatpush.msra.mxu0 0.0
    %488 = vmatpush.msra.mxu0 0.0
    %489 = vmatpush.msra.mxu0 0.0
    %490 = vmatpush.msra.mxu0 0.0
    %491 = vmatpush.msra.mxu0 %v475
    %492 = vmatpush.msra.mxu0 %v468
    %493 = vmatmul.f32.gmra.mxu0 %v472
    %v494 = vpop.f32.mrf.mxu0
    %v495 = vadd.f32 0.0, %v494
    %496 = vdwg.mxu0
    %500 = vst [vmem:[#allocation1] ss:$2 sm:$0xff] %v457
    %s501 = scalar_lea.vmem [#allocation1], 1
    %502 = vst [vmem:[%s501] ss:$2 sm:$0xff] %v458
    %s503 = scalar_lea.vmem [#allocation1], 16
    %504 = vst [vmem:[%s503] ss:$2 sm:$0xff] %v459
    %v505 = vld.sshfl [vmem:[#allocation1] sm:$0xff pattern:$0x75316420]
    %v506 = vld.sshfl [vmem:[#allocation1 + $0x10] sm:$0xff pattern:$0x75316420]
    %v509 = vsel %vm263, %v450, 0
    %v511 = vsel %vm474, %v506, 0
    %513 = vmatpush.msra.mxu0 0.0
    %514 = vmatpush.msra.mxu0 0.0
    %515 = vmatpush.msra.mxu0 0.0
    %516 = vmatpush.msra.mxu0 0.0
    %517 = vmatpush.msra.mxu0 0.0
    %518 = vmatpush.msra.mxu0 0.0
    %519 = vmatpush.msra.mxu0 0.0
    %520 = vmatpush.msra.mxu0 0.0
    %521 = vmatpush.msra.mxu0 0.0
    %522 = vmatpush.msra.mxu0 0.0
    %523 = vmatpush.msra.mxu0 0.0
    %524 = vmatpush.msra.mxu0 0.0
    %525 = vmatpush.msra.mxu0 0.0
    %526 = vmatpush.msra.mxu0 0.0
    %527 = vmatpush.msra.mxu0 %v511
    %528 = vmatpush.msra.mxu0 %v505
    %529 = vmatmul.f32.gmra.mxu0 %v509
    %v530 = vpop.f32.mrf.mxu0
    %v531 = vadd.f32 0.0, %v530
    %532 = vdwg.mxu0
    %536 = vst [vmem:[#allocation1] ss:$2 sm:$0xff] %v315
    %s537 = scalar_lea.vmem [#allocation1], 1
    %538 = vst [vmem:[%s537] ss:$2 sm:$0xff] %v316
    %s539 = scalar_lea.vmem [#allocation1], 16
    %540 = vst [vmem:[%s539] ss:$2 sm:$0xff] %v317
    %v541 = vld.sshfl [vmem:[#allocation1] sm:$0xff pattern:$0x75316420]
    %v542 = vld.sshfl [vmem:[#allocation1 + $0x10] sm:$0xff pattern:$0x75316420]
    %v545 = vsel %vm263, %v296, 0
    %v547 = vsel %vm474, %v542, 0
    %549 = vmatpush.msra.mxu0 0.0
    %550 = vmatpush.msra.mxu0 0.0
    %551 = vmatpush.msra.mxu0 0.0
    %552 = vmatpush.msra.mxu0 0.0
    %553 = vmatpush.msra.mxu0 0.0
    %554 = vmatpush.msra.mxu0 0.0
    %555 = vmatpush.msra.mxu0 0.0
    %556 = vmatpush.msra.mxu0 0.0
    %557 = vmatpush.msra.mxu0 0.0
    %558 = vmatpush.msra.mxu0 0.0
    %559 = vmatpush.msra.mxu0 0.0
    %560 = vmatpush.msra.mxu0 0.0
    %561 = vmatpush.msra.mxu0 0.0
    %562 = vmatpush.msra.mxu0 0.0
    %563 = vmatpush.msra.mxu0 %v547
    %564 = vmatpush.msra.mxu0 %v541
    %565 = vmatmul.f32.gmra.mxu0 %v545
    %v566 = vpop.f32.mrf.mxu0
    %v567 = vadd.f32 %v495, %v566
    %568 = vdwg.mxu0
    %572 = vst [vmem:[#allocation1] ss:$2 sm:$0xff] %v318
    %s573 = scalar_lea.vmem [#allocation1], 1
    %574 = vst [vmem:[%s573] ss:$2 sm:$0xff] %v319
    %s575 = scalar_lea.vmem [#allocation1], 16
    %576 = vst [vmem:[%s575] ss:$2 sm:$0xff] %v320
    %v577 = vld.sshfl [vmem:[#allocation1] sm:$0xff pattern:$0x75316420]
    %v578 = vld.sshfl [vmem:[#allocation1 + $0x10] sm:$0xff pattern:$0x75316420]
    %v581 = vsel %vm263, %v311, 0
    %v583 = vsel %vm474, %v578, 0
    %585 = vmatpush.msra.mxu0 0.0
    %586 = vmatpush.msra.mxu0 0.0
    %587 = vmatpush.msra.mxu0 0.0
    %588 = vmatpush.msra.mxu0 0.0
    %589 = vmatpush.msra.mxu0 0.0
    %590 = vmatpush.msra.mxu0 0.0
    %591 = vmatpush.msra.mxu0 0.0
    %592 = vmatpush.msra.mxu0 0.0
    %593 = vmatpush.msra.mxu0 0.0
    %594 = vmatpush.msra.mxu0 0.0
    %595 = vmatpush.msra.mxu0 0.0
    %596 = vmatpush.msra.mxu0 0.0
    %597 = vmatpush.msra.mxu0 0.0
    %598 = vmatpush.msra.mxu0 0.0
    %599 = vmatpush.msra.mxu0 %v583
    %600 = vmatpush.msra.mxu0 %v577
    %601 = vmatmul.f32.gmra.mxu0 %v581
    %v602 = vpop.f32.mrf.mxu0
    %v603 = vadd.f32 %v531, %v602
    %604 = vdwg.mxu0
    %vm605 = vcmp.ge.s32.totalorder %v179, 16
    %vm606 = vcmp.lt.s32.totalorder %v179, 24
    %vm607 = vmand %vm605, %vm606
    %v608 = vsel %vm607, 1, 0
    %v609 = vcvt.s32.f32 %v608
    %vm610 = vcmp.ge.s32.totalorder %v179, 48
    %vm611 = vcmp.lt.s32.totalorder %v179, 56
    %vm612 = vmand %vm610, %vm611
    %v613 = vsel %vm612, 1, 0
    %v614 = vcvt.s32.f32 %v613
    %v615 = vmul.f32 %v124, %v609
    %v616 = vmul.f32 %v127, %v609
    %617 = vst [vmem:[#allocation1] ss:$2 sm:$0xff] %v161
    %s618 = scalar_lea.vmem [#allocation1], 1
    %619 = vst [vmem:[%s618] ss:$2 sm:$0xff] %v172
    %s620 = scalar_lea.vmem [#allocation1], 16
    %621 = vst [vmem:[%s620] ss:$2 sm:$0xff] %v164
    %v622 = vld.sshfl [vmem:[#allocation1] sm:$0xff pattern:$0x75316420]
    %v623 = vld.sshfl [vmem:[#allocation1 + $0x10] sm:$0xff pattern:$0x75316420]
    %v625 = vsel %vm199, %v615, 0
    %v627 = vsel %vm199, %v622, 0
    %v629 = vsel %vm199, %v623, 0
    %631 = vmatpush.xpose.msra.mxu0 0.0
    %632 = vmatpush.xpose.msra.mxu0 0.0
    %633 = vmatpush.xpose.msra.mxu0 0.0
    %634 = vmatpush.xpose.msra.mxu0 0.0
    %635 = vmatpush.xpose.msra.mxu0 0.0
    %636 = vmatpush.xpose.msra.mxu0 0.0
    %637 = vmatpush.xpose.msra.mxu0 0.0
    %638 = vmatpush.xpose.msra.mxu0 0.0
    %639 = vmatpush.xpose.msra.mxu0 0.0
    %640 = vmatpush.xpose.msra.mxu0 0.0
    %641 = vmatpush.xpose.msra.mxu0 0.0
    %642 = vmatpush.xpose.msra.mxu0 0.0
    %643 = vmatpush.xpose.msra.mxu0 0.0
    %644 = vmatpush.xpose.msra.mxu0 0.0
    %645 = vmatpush.xpose.msra.mxu0 %v629
    %646 = vmatpush.xpose.msra.mxu0 %v627
    %647 = vmatmul.f32.gmra.mxu0 %v625
    %v648 = vpop.f32.mrf.mxu0
    %v649 = vadd.f32 0.0, %v648
    %650 = vdwg.mxu0
    %651 = vst [vmem:[#allocation1] ss:$2 sm:$0xff] %v173
    %s652 = scalar_lea.vmem [#allocation1], 1
    %653 = vst [vmem:[%s652] ss:$2 sm:$0xff] %v167
    %s654 = scalar_lea.vmem [#allocation1], 16
    %655 = vst [vmem:[%s654] ss:$2 sm:$0xff] %v174
    %v656 = vld.sshfl [vmem:[#allocation1] sm:$0xff pattern:$0x75316420]
    %v657 = vld.sshfl [vmem:[#allocation1 + $0x10] sm:$0xff pattern:$0x75316420]
    %v659 = vsel %vm199, %v616, 0
    %v661 = vsel %vm199, %v656, 0
    %v663 = vsel %vm199, %v657, 0
    %665 = vmatpush.xpose.msra.mxu0 0.0
    %666 = vmatpush.xpose.msra.mxu0 0.0
    %667 = vmatpush.xpose.msra.mxu0 0.0
    %668 = vmatpush.xpose.msra.mxu0 0.0
    %669 = vmatpush.xpose.msra.mxu0 0.0
    %670 = vmatpush.xpose.msra.mxu0 0.0
    %671 = vmatpush.xpose.msra.mxu0 0.0
    %672 = vmatpush.xpose.msra.mxu0 0.0
    %673 = vmatpush.xpose.msra.mxu0 0.0
    %674 = vmatpush.xpose.msra.mxu0 0.0
    %675 = vmatpush.xpose.msra.mxu0 0.0
    %676 = vmatpush.xpose.msra.mxu0 0.0
    %677 = vmatpush.xpose.msra.mxu0 0.0
    %678 = vmatpush.xpose.msra.mxu0 0.0
    %679 = vmatpush.xpose.msra.mxu0 %v663
    %680 = vmatpush.xpose.msra.mxu0 %v661
    %681 = vmatmul.f32.gmra.mxu0 %v659
    %v682 = vpop.f32.mrf.mxu0
    %v683 = vadd.f32 0.0, %v682
    %684 = vdwg.mxu0
    %v685 = vmul.f32 %v649, 0.35355338
    %v686 = vmul.f32 %v683, 0.35355338
    %v687 = vsel %vm263, %v685, -inf
    %688 = vmax.xlane.f32.xlu0 %v687
    %v689 = vpop.xlane.xlu0 %688
    %v690 = vsel %vm263, %v686, -inf
    %691 = vmax.xlane.f32.xlu0 %v690
    %v692 = vpop.xlane.xlu0 %691
    %v693 = vsub.f32 %v685, %v689
    %v694 = vsub.f32 %v686, %v692
    %v695 = vmul.f32 %v693, 1.442695
    %v696 = vpow.pop %v695
    %v697 = vmul.f32 %v694, 1.442695
    %v698 = vpow.pop %v697
    %v699 = vsel %vm263, %v696, 0.0
    %700 = vadd.xlane.f32.xlu0 %v699
    %v701 = vpop.xlane.xlu0 %700
    %v702 = vsel %vm263, %v698, 0.0
    %703 = vadd.xlane.f32.xlu0 %v702
    %v704 = vpop.xlane.xlu0 %703
    %v705 = vrcp.pop %v701
    %v706 = vmul.f32 %v701, %v705
    %v707 = vsub.f32 1.0, %v706
    %v708 = vmul.f32 %v705, %v707
    %v709 = vadd.f32 %v705, %v708
    %vm710 = vweird.f32 %v701
    %vm711 = vweird.f32 %v705
    %vm712 = vmor %vm710, %vm711
    %v713 = vsel %vm712, %v705, %v709
    %v714 = vand.u32 2147483647, %v701
    %vm715 = vcmp.eq.f32.partialorder %v714, 8.507059e+37
    %v716 = vand.u32 %v701, 2147483648
    %v717 = vor.u32 1.1754944e-38, %v716
    %v718 = vsel %vm715, %v717, %v713
    %v719 = vmul.f32 %v696, %v718
    %v720 = vrcp.pop %v704
    %v721 = vmul.f32 %v704, %v720
    %v722 = vsub.f32 1.0, %v721
    %v723 = vmul.f32 %v720, %v722
    %v724 = vadd.f32 %v720, %v723
    %vm725 = vweird.f32 %v704
    %vm726 = vweird.f32 %v720
    %vm727 = vmor %vm725, %vm726
    %v728 = vsel %vm727, %v720, %v724
    %v729 = vand.u32 2147483647, %v704
    %vm730 = vcmp.eq.f32.partialorder %v729, 8.507059e+37
    %v731 = vand.u32 %v704, 2147483648
    %v732 = vor.u32 1.1754944e-38, %v731
    %v733 = vsel %vm730, %v732, %v728
    %v734 = vmul.f32 %v698, %v733
    %v736 = vrot.slane %v614, 4
    %v738 = vmul.f32 %v161, %v614
    %v739 = vmul.f32 %v172, %v736
    %v740 = vmul.f32 %v164, %v614
    %v741 = vmul.f32 %v173, %v614
    %v742 = vmul.f32 %v167, %v736
    %v743 = vmul.f32 %v174, %v614
    %747 = vst [vmem:[#allocation1] ss:$2 sm:$0xff] %v738
    %s748 = scalar_lea.vmem [#allocation1], 1
    %749 = vst [vmem:[%s748] ss:$2 sm:$0xff] %v739
    %s750 = scalar_lea.vmem [#allocation1], 16
    %751 = vst [vmem:[%s750] ss:$2 sm:$0xff] %v740
    %v752 = vld.sshfl [vmem:[#allocation1] sm:$0xff pattern:$0x75316420]
    %v753 = vld.sshfl [vmem:[#allocation1 + $0x10] sm:$0xff pattern:$0x75316420]
    %v756 = vsel %vm263, %v719, 0
    %v758 = vsel %vm474, %v753, 0
    %760 = vmatpush.msra.mxu0 0.0
    %761 = vmatpush.msra.mxu0 0.0
    %762 = vmatpush.msra.mxu0 0.0
    %763 = vmatpush.msra.mxu0 0.0
    %764 = vmatpush.msra.mxu0 0.0
    %765 = vmatpush.msra.mxu0 0.0
    %766 = vmatpush.msra.mxu0 0.0
    %767 = vmatpush.msra.mxu0 0.0
    %768 = vmatpush.msra.mxu0 0.0
    %769 = vmatpush.msra.mxu0 0.0
    %770 = vmatpush.msra.mxu0 0.0
    %771 = vmatpush.msra.mxu0 0.0
    %772 = vmatpush.msra.mxu0 0.0
    %773 = vmatpush.msra.mxu0 0.0
    %774 = vmatpush.msra.mxu0 %v758
    %775 = vmatpush.msra.mxu0 %v752
    %776 = vmatmul.f32.gmra.mxu0 %v756
    %v777 = vpop.f32.mrf.mxu0
    %v778 = vadd.f32 0.0, %v777
    %779 = vdwg.mxu0
    %783 = vst [vmem:[#allocation1] ss:$2 sm:$0xff] %v741
    %s784 = scalar_lea.vmem [#allocation1], 1
    %785 = vst [vmem:[%s784] ss:$2 sm:$0xff] %v742
    %s786 = scalar_lea.vmem [#allocation1], 16
    %787 = vst [vmem:[%s786] ss:$2 sm:$0xff] %v743
    %v788 = vld.sshfl [vmem:[#allocation1] sm:$0xff pattern:$0x75316420]
    %v789 = vld.sshfl [vmem:[#allocation1 + $0x10] sm:$0xff pattern:$0x75316420]
    %v792 = vsel %vm263, %v734, 0
    %v794 = vsel %vm474, %v789, 0
    %796 = vmatpush.msra.mxu0 0.0
    %797 = vmatpush.msra.mxu0 0.0
    %798 = vmatpush.msra.mxu0 0.0
    %799 = vmatpush.msra.mxu0 0.0
    %800 = vmatpush.msra.mxu0 0.0
    %801 = vmatpush.msra.mxu0 0.0
    %802 = vmatpush.msra.mxu0 0.0
    %803 = vmatpush.msra.mxu0 0.0
    %804 = vmatpush.msra.mxu0 0.0
    %805 = vmatpush.msra.mxu0 0.0
    %806 = vmatpush.msra.mxu0 0.0
    %807 = vmatpush.msra.mxu0 0.0
    %808 = vmatpush.msra.mxu0 0.0
    %809 = vmatpush.msra.mxu0 0.0
    %810 = vmatpush.msra.mxu0 %v794
    %811 = vmatpush.msra.mxu0 %v788
    %812 = vmatmul.f32.gmra.mxu0 %v792
    %v813 = vpop.f32.mrf.mxu0
    %v814 = vadd.f32 0.0, %v813
    %815 = vdwg.mxu0
    %v816 = vadd.f32 %v567, %v778
    %v817 = vadd.f32 %v603, %v814
    %vm818 = vcmp.ge.s32.totalorder %v179, 24
    %vm819 = vcmp.lt.s32.totalorder %v179, 32
    %vm820 = vmand %vm818, %vm819
    %v821 = vsel %vm820, 1, 0
    %v822 = vcvt.s32.f32 %v821
    %vm823 = vcmp.ge.s32.totalorder %v179, 56
    %vm824 = vcmp.lt.s32.totalorder %v179, 64
    %vm825 = vmand %vm823, %vm824
    %v826 = vsel %vm825, 1, 0
    %v827 = vcvt.s32.f32 %v826
    %v828 = vmul.f32 %v124, %v822
    %v829 = vmul.f32 %v127, %v822
    %830 = vst [vmem:[#allocation1] ss:$2 sm:$0xff] %v161
    %s831 = scalar_lea.vmem [#allocation1], 1
    %832 = vst [vmem:[%s831] ss:$2 sm:$0xff] %v172
    %s833 = scalar_lea.vmem [#allocation1], 16
    %834 = vst [vmem:[%s833] ss:$2 sm:$0xff] %v164
    %v835 = vld.sshfl [vmem:[#allocation1] sm:$0xff pattern:$0x75316420]
    %v836 = vld.sshfl [vmem:[#allocation1 + $0x10] sm:$0xff pattern:$0x75316420]
    %v838 = vsel %vm199, %v828, 0
    %v840 = vsel %vm199, %v835, 0
    %v842 = vsel %vm199, %v836, 0
    %844 = vmatpush.xpose.msra.mxu0 0.0
    %845 = vmatpush.xpose.msra.mxu0 0.0
    %846 = vmatpush.xpose.msra.mxu0 0.0
    %847 = vmatpush.xpose.msra.mxu0 0.0
    %848 = vmatpush.xpose.msra.mxu0 0.0
    %849 = vmatpush.xpose.msra.mxu0 0.0
    %850 = vmatpush.xpose.msra.mxu0 0.0
    %851 = vmatpush.xpose.msra.mxu0 0.0
    %852 = vmatpush.xpose.msra.mxu0 0.0
    %853 = vmatpush.xpose.msra.mxu0 0.0
    %854 = vmatpush.xpose.msra.mxu0 0.0
    %855 = vmatpush.xpose.msra.mxu0 0.0
    %856 = vmatpush.xpose.msra.mxu0 0.0
    %857 = vmatpush.xpose.msra.mxu0 0.0
    %858 = vmatpush.xpose.msra.mxu0 %v842
    %859 = vmatpush.xpose.msra.mxu0 %v840
    %860 = vmatmul.f32.gmra.mxu0 %v838
    %v861 = vpop.f32.mrf.mxu0
    %v862 = vadd.f32 0.0, %v861
    %863 = vdwg.mxu0
    %864 = vst [vmem:[#allocation1] ss:$2 sm:$0xff] %v173
    %s865 = scalar_lea.vmem [#allocation1], 1
    %866 = vst [vmem:[%s865] ss:$2 sm:$0xff] %v167
    %s867 = scalar_lea.vmem [#allocation1], 16
    %868 = vst [vmem:[%s867] ss:$2 sm:$0xff] %v174
    %v869 = vld.sshfl [vmem:[#allocation1] sm:$0xff pattern:$0x75316420]
    %v870 = vld.sshfl [vmem:[#allocation1 + $0x10] sm:$0xff pattern:$0x75316420]
    %v872 = vsel %vm199, %v829, 0
    %v874 = vsel %vm199, %v869, 0
    %v876 = vsel %vm199, %v870, 0
    %878 = vmatpush.xpose.msra.mxu0 0.0
    %879 = vmatpush.xpose.msra.mxu0 0.0
    %880 = vmatpush.xpose.msra.mxu0 0.0
    %881 = vmatpush.xpose.msra.mxu0 0.0
    %882 = vmatpush.xpose.msra.mxu0 0.0
    %883 = vmatpush.xpose.msra.mxu0 0.0
    %884 = vmatpush.xpose.msra.mxu0 0.0
    %885 = vmatpush.xpose.msra.mxu0 0.0
    %886 = vmatpush.xpose.msra.mxu0 0.0
    %887 = vmatpush.xpose.msra.mxu0 0.0
    %888 = vmatpush.xpose.msra.mxu0 0.0
    %889 = vmatpush.xpose.msra.mxu0 0.0
    %890 = vmatpush.xpose.msra.mxu0 0.0
    %891 = vmatpush.xpose.msra.mxu0 0.0
    %892 = vmatpush.xpose.msra.mxu0 %v876
    %893 = vmatpush.xpose.msra.mxu0 %v874
    %894 = vmatmul.f32.gmra.mxu0 %v872
    %v895 = vpop.f32.mrf.mxu0
    %v896 = vadd.f32 0.0, %v895
    %897 = vdwg.mxu0
    %v898 = vmul.f32 %v862, 0.35355338
    %v899 = vmul.f32 %v896, 0.35355338
    %v900 = vsel %vm263, %v898, -inf
    %901 = vmax.xlane.f32.xlu0 %v900
    %v902 = vpop.xlane.xlu0 %901
    %v903 = vsel %vm263, %v899, -inf
    %904 = vmax.xlane.f32.xlu0 %v903
    %v905 = vpop.xlane.xlu0 %904
    %v906 = vsub.f32 %v898, %v902
    %v907 = vsub.f32 %v899, %v905
    %v908 = vmul.f32 %v906, 1.442695
    %v909 = vpow.pop %v908
    %v910 = vmul.f32 %v907, 1.442695
    %v911 = vpow.pop %v910
    %v912 = vsel %vm263, %v909, 0.0
    %913 = vadd.xlane.f32.xlu0 %v912
    %v914 = vpop.xlane.xlu0 %913
    %v915 = vsel %vm263, %v911, 0.0
    %916 = vadd.xlane.f32.xlu0 %v915
    %v917 = vpop.xlane.xlu0 %916
    %v918 = vrcp.pop %v914
    %v919 = vmul.f32 %v914, %v918
    %v920 = vsub.f32 1.0, %v919
    %v921 = vmul.f32 %v918, %v920
    %v922 = vadd.f32 %v918, %v921
    %vm923 = vweird.f32 %v914
    %vm924 = vweird.f32 %v918
    %vm925 = vmor %vm923, %vm924
    %v926 = vsel %vm925, %v918, %v922
    %v927 = vand.u32 2147483647, %v914
    %vm928 = vcmp.eq.f32.partialorder %v927, 8.507059e+37
    %v929 = vand.u32 %v914, 2147483648
    %v930 = vor.u32 1.1754944e-38, %v929
    %v931 = vsel %vm928, %v930, %v926
    %v932 = vmul.f32 %v909, %v931
    %v933 = vrcp.pop %v917
    %v934 = vmul.f32 %v917, %v933
    %v935 = vsub.f32 1.0, %v934
    %v936 = vmul.f32 %v933, %v935
    %v937 = vadd.f32 %v933, %v936
    %vm938 = vweird.f32 %v917
    %vm939 = vweird.f32 %v933
    %vm940 = vmor %vm938, %vm939
    %v941 = vsel %vm940, %v933, %v937
    %v942 = vand.u32 2147483647, %v917
    %vm943 = vcmp.eq.f32.partialorder %v942, 8.507059e+37
    %v944 = vand.u32 %v917, 2147483648
    %v945 = vor.u32 1.1754944e-38, %v944
    %v946 = vsel %vm943, %v945, %v941
    %v947 = vmul.f32 %v911, %v946
    %v949 = vrot.slane %v827, 4
    %v951 = vmul.f32 %v161, %v827
    %v952 = vmul.f32 %v172, %v949
    %v953 = vmul.f32 %v164, %v827
    %v954 = vmul.f32 %v173, %v827
    %v955 = vmul.f32 %v167, %v949
    %v956 = vmul.f32 %v174, %v827
    %960 = vst [vmem:[#allocation1] ss:$2 sm:$0xff] %v951
    %s961 = scalar_lea.vmem [#allocation1], 1
    %962 = vst [vmem:[%s961] ss:$2 sm:$0xff] %v952
    %s963 = scalar_lea.vmem [#allocation1], 16
    %964 = vst [vmem:[%s963] ss:$2 sm:$0xff] %v953
    %v965 = vld.sshfl [vmem:[#allocation1] sm:$0xff pattern:$0x75316420]
    %v966 = vld.sshfl [vmem:[#allocation1 + $0x10] sm:$0xff pattern:$0x75316420]
    %v969 = vsel %vm263, %v932, 0
    %v971 = vsel %vm474, %v966, 0
    %973 = vmatpush.msra.mxu0 0.0
    %974 = vmatpush.msra.mxu0 0.0
    %975 = vmatpush.msra.mxu0 0.0
    %976 = vmatpush.msra.mxu0 0.0
    %977 = vmatpush.msra.mxu0 0.0
    %978 = vmatpush.msra.mxu0 0.0
    %979 = vmatpush.msra.mxu0 0.0
    %980 = vmatpush.msra.mxu0 0.0
    %981 = vmatpush.msra.mxu0 0.0
    %982 = vmatpush.msra.mxu0 0.0
    %983 = vmatpush.msra.mxu0 0.0
    %984 = vmatpush.msra.mxu0 0.0
    %985 = vmatpush.msra.mxu0 0.0
    %986 = vmatpush.msra.mxu0 0.0
    %987 = vmatpush.msra.mxu0 %v971
    %988 = vmatpush.msra.mxu0 %v965
    %989 = vmatmul.f32.gmra.mxu0 %v969
    %v990 = vpop.f32.mrf.mxu0
    %v991 = vadd.f32 0.0, %v990
    %992 = vdwg.mxu0
    %996 = vst [vmem:[#allocation1] ss:$2 sm:$0xff] %v954
    %s997 = scalar_lea.vmem [#allocation1], 1
    %998 = vst [vmem:[%s997] ss:$2 sm:$0xff] %v955
    %s999 = scalar_lea.vmem [#allocation1], 16
    %1000 = vst [vmem:[%s999] ss:$2 sm:$0xff] %v956
    %v1001 = vld.sshfl [vmem:[#allocation1] sm:$0xff pattern:$0x75316420]
    %v1002 = vld.sshfl [vmem:[#allocation1 + $0x10] sm:$0xff pattern:$0x75316420]
    %v1005 = vsel %vm263, %v947, 0
    %v1007 = vsel %vm474, %v1002, 0
    %1009 = vmatpush.msra.mxu0 0.0
    %1010 = vmatpush.msra.mxu0 0.0
    %1011 = vmatpush.msra.mxu0 0.0
    %1012 = vmatpush.msra.mxu0 0.0
    %1013 = vmatpush.msra.mxu0 0.0
    %1014 = vmatpush.msra.mxu0 0.0
    %1015 = vmatpush.msra.mxu0 0.0
    %1016 = vmatpush.msra.mxu0 0.0
    %1017 = vmatpush.msra.mxu0 0.0
    %1018 = vmatpush.msra.mxu0 0.0
    %1019 = vmatpush.msra.mxu0 0.0
    %1020 = vmatpush.msra.mxu0 0.0
    %1021 = vmatpush.msra.mxu0 0.0
    %1022 = vmatpush.msra.mxu0 0.0
    %1023 = vmatpush.msra.mxu0 %v1007
    %1024 = vmatpush.msra.mxu0 %v1001
    %1025 = vmatmul.f32.gmra.mxu0 %v1005
    %v1026 = vpop.f32.mrf.mxu0
    %v1027 = vadd.f32 0.0, %v1026
    %1028 = vdwg.mxu0
    %v1029 = vadd.f32 %v816, %v991
    %v1030 = vadd.f32 %v817, %v1027
    %v1031 = vld [vmem:[%s4] sm:$0xff]
    %v1032 = vld [vmem:[%s4 + $0x8] sm:$0xff]
    %v1033 = vld [vmem:[%s4 + $0x10] sm:$0xff]
    %v1034 = vld [vmem:[%s4 + $0x18] sm:$0xff]
    %v1035 = vld [vmem:[%s4 + $0x20] sm:$0xff]
    %v1036 = vld [vmem:[%s4 + $0x28] sm:$0xff]
    %v1037 = vld [vmem:[%s4 + $0x30] sm:$0xff]
    %v1038 = vld [vmem:[%s4 + $0x38] sm:$0xff]
    %v1039 = vperm.slane %v35, 4
    %v1041 = vsel %vm199, %v1029, 0
    %v1044 = vsel %vm199, %v1030, 0
    %1046 = vmatpush.msra.mxu0 0.0
    %1047 = vmatpush.msra.mxu0 0.0
    %1048 = vmatpush.msra.mxu0 0.0
    %1049 = vmatpush.msra.mxu0 0.0
    %1050 = vmatpush.msra.mxu0 0.0
    %1051 = vmatpush.msra.mxu0 0.0
    %1052 = vmatpush.msra.mxu0 0.0
    %1053 = vmatpush.msra.mxu0 0.0
    %1054 = vmatpush.msra.mxu0 %v1038
    %1055 = vmatpush.msra.mxu0 %v1037
    %1056 = vmatpush.msra.mxu0 %v1036
    %1057 = vmatpush.msra.mxu0 %v1035
    %1058 = vmatpush.msra.mxu0 %v1034
    %1059 = vmatpush.msra.mxu0 %v1033
    %1060 = vmatpush.msra.mxu0 %v1032
    %1061 = vmatpush.msra.mxu0 %v1031
    %1062 = vmatmul.f32.gmra.mxu0 %v1041
    %v1063 = vpop.f32.mrf.mxu0
    %v1064 = vadd.f32 %v1039, %v1063
    %1065 = vmatmul.f32.gmra.mxu0 %v1044
    %v1066 = vpop.f32.mrf.mxu0
    %v1067 = vadd.f32 %v1039, %v1066
    %1068 = vdwg.mxu0
    %v1069 = vadd.f32 %v30, %v1064
    %v1070 = vadd.f32 %v31, %v1067
    %v1071 = vsel %vm37, %v1069, 0.0
    %1072 = vadd.xlane.f32.xlu0 %v1071
    %v1073 = vpop.xlane.xlu0 %1072
    %v1074 = vsel %vm37, %v1070, 0.0
    %1075 = vadd.xlane.f32.xlu0 %v1074
    %v1076 = vpop.xlane.xlu0 %1075
    %v1077 = vmul.f32 %v1073, %v50
    %v1078 = vmul.f32 %v1076, %v50
    %v1079 = vsub.f32 %v1069, %v1077
    %v1080 = vsub.f32 %v1070, %v1078
    %v1081 = vmul.f32 %v1079, %v1079
    %v1082 = vmul.f32 %v1080, %v1080
    %v1083 = vsel %vm37, %v1081, 0.0
    %1084 = vadd.xlane.f32.xlu0 %v1083
    %v1085 = vpop.xlane.xlu0 %1084
    %v1086 = vsel %vm37, %v1082, 0.0
    %1087 = vadd.xlane.f32.xlu0 %v1086
    %v1088 = vpop.xlane.xlu0 %1087
    %v1089 = vmul.f32 %v1085, %v50
    %v1090 = vmul.f32 %v1088, %v50
    %v1091 = vadd.f32 %v1089, 1e-05
    %v1092 = vadd.f32 %v1090, 1e-05
    %v1093 = vrsqrt.pop %v1091
    %v1094 = vmul.f32 %v1093, %v1091
    %v1095 = vmul.f32 %v1094, %v1093
    %v1096 = vmul.f32 0.5, %v1095
    %v1097 = vsub.f32 1.5, %v1096
    %v1098 = vmul.f32 %v1093, %v1097
    %vm1099 = vweird.f32 %v1091
    %vm1100 = vweird.f32 %v1093
    %vm1101 = vmor %vm1099, %vm1100
    %v1102 = vsel %vm1101, %v1093, %v1098
    %v1103 = vrsqrt.pop %v1092
    %v1104 = vmul.f32 %v1103, %v1092
    %v1105 = vmul.f32 %v1104, %v1103
    %v1106 = vmul.f32 0.5, %v1105
    %v1107 = vsub.f32 1.5, %v1106
    %v1108 = vmul.f32 %v1103, %v1107
    %vm1109 = vweird.f32 %v1092
    %vm1110 = vweird.f32 %v1103
    %vm1111 = vmor %vm1109, %vm1110
    %v1112 = vsel %vm1111, %v1103, %v1108
    %v1113 = vmul.f32 %v1079, %v1102
    %v1114 = vmul.f32 %v1080, %v1112
    %v1115 = vmul.f32 %v1113, %v89
    %v1116 = vmul.f32 %v1114, %v89
    %v1117 = vadd.f32 %v1115, %v92
    %v1118 = vadd.f32 %v1116, %v92
    %v1119 = vld [vmem:[%s5] sm:$0xff]
    %v1120 = vld [vmem:[%s5 + $0x8] sm:$0xff]
    %v1121 = vld [vmem:[%s5 + $0x10] sm:$0xff]
    %v1122 = vld [vmem:[%s5 + $0x18] sm:$0xff]
    %v1123 = vperm.slane %v35, 7
    %v1125 = vsel %vm37, %v1117, 0
    %v1128 = vsel %vm37, %v1118, 0
    %1130 = vmatpush.msra.mxu0 0.0
    %1131 = vmatpush.msra.mxu0 0.0
    %1132 = vmatpush.msra.mxu0 0.0
    %1133 = vmatpush.msra.mxu0 0.0
    %1134 = vmatpush.msra.mxu0 0.0
    %1135 = vmatpush.msra.mxu0 0.0
    %1136 = vmatpush.msra.mxu0 0.0
    %1137 = vmatpush.msra.mxu0 0.0
    %1138 = vmatpush.msra.mxu0 0.0
    %1139 = vmatpush.msra.mxu0 0.0
    %1140 = vmatpush.msra.mxu0 0.0
    %1141 = vmatpush.msra.mxu0 0.0
    %1142 = vmatpush.msra.mxu0 %v1122
    %1143 = vmatpush.msra.mxu0 %v1121
    %1144 = vmatpush.msra.mxu0 %v1120
    %1145 = vmatpush.msra.mxu0 %v1119
    %1146 = vmatmul.f32.gmra.mxu0 %v1125
    %v1147 = vpop.f32.mrf.mxu0
    %v1148 = vadd.f32 %v1123, %v1147
    %1149 = vmatmul.f32.gmra.mxu0 %v1128
    %v1150 = vpop.f32.mrf.mxu0
    %v1151 = vadd.f32 %v1123, %v1150
    %1152 = vdwg.mxu0
    %v1153 = vmax.f32 %v1148, 0.0
    %v1154 = vmax.f32 %v1151, 0.0
    %v1155 = vld [vmem:[%s6] sm:$0xff]
    %v1156 = vld [vmem:[%s6 + $0x8] sm:$0xff]
    %v1157 = vld [vmem:[%s6 + $0x10] sm:$0xff]
    %v1158 = vld [vmem:[%s6 + $0x18] sm:$0xff]
    %v1159 = vld [vmem:[%s6 + $0x20] sm:$0xff]
    %v1160 = vld [vmem:[%s6 + $0x28] sm:$0xff]
    %v1161 = vld [vmem:[%s6 + $0x30] sm:$0xff]
    %v1162 = vld [vmem:[%s6 + $0x38] sm:$0xff]
    %v1163 = vperm.slane %v36, 0
    %v1165 = vsel %vm199, %v1153, 0
    %v1168 = vsel %vm199, %v1154, 0
    %1170 = vmatpush.msra.mxu0 0.0
    %1171 = vmatpush.msra.mxu0 0.0
    %1172 = vmatpush.msra.mxu0 0.0
    %1173 = vmatpush.msra.mxu0 0.0
    %1174 = vmatpush.msra.mxu0 0.0
    %1175 = vmatpush.msra.mxu0 0.0
    %1176 = vmatpush.msra.mxu0 0.0
    %1177 = vmatpush.msra.mxu0 0.0
    %1178 = vmatpush.msra.mxu0 %v1162
    %1179 = vmatpush.msra.mxu0 %v1161
    %1180 = vmatpush.msra.mxu0 %v1160
    %1181 = vmatpush.msra.mxu0 %v1159
    %1182 = vmatpush.msra.mxu0 %v1158
    %1183 = vmatpush.msra.mxu0 %v1157
    %1184 = vmatpush.msra.mxu0 %v1156
    %1185 = vmatpush.msra.mxu0 %v1155
    %1186 = vmatmul.f32.gmra.mxu0 %v1165
    %v1187 = vpop.f32.mrf.mxu0
    %v1188 = vadd.f32 %v1163, %v1187
    %1189 = vmatmul.f32.gmra.mxu0 %v1168
    %v1190 = vpop.f32.mrf.mxu0
    %v1191 = vadd.f32 %v1163, %v1190
    %1192 = vdwg.mxu0
    %v1193 = vadd.f32 %v1117, %v1188
    %v1194 = vadd.f32 %v1118, %v1191
    %v1195 = vsel %vm37, %v1193, 0.0
    %1196 = vadd.xlane.f32.xlu0 %v1195
    %v1197 = vpop.xlane.xlu0 %1196
    %v1198 = vsel %vm37, %v1194, 0.0
    %1199 = vadd.xlane.f32.xlu0 %v1198
    %v1200 = vpop.xlane.xlu0 %1199
    %v1201 = vmul.f32 %v1197, %v50
    %v1202 = vmul.f32 %v1200, %v50
    %v1203 = vsub.f32 %v1193, %v1201
    %v1204 = vsub.f32 %v1194, %v1202
    %v1205 = vmul.f32 %v1203, %v1203
    %v1206 = vmul.f32 %v1204, %v1204
    %v1207 = vsel %vm37, %v1205, 0.0
    %1208 = vadd.xlane.f32.xlu0 %v1207
    %v1209 = vpop.xlane.xlu0 %1208
    %v1210 = vsel %vm37, %v1206, 0.0
    %1211 = vadd.xlane.f32.xlu0 %v1210
    %v1212 = vpop.xlane.xlu0 %1211
    %v1213 = vmul.f32 %v1209, %v50
    %v1214 = vmul.f32 %v1212, %v50
    %v1215 = vadd.f32 %v1213, 1e-05
    %v1216 = vadd.f32 %v1214, 1e-05
    %v1217 = vrsqrt.pop %v1215
    %v1218 = vmul.f32 %v1217, %v1215
    %v1219 = vmul.f32 %v1218, %v1217
    %v1220 = vmul.f32 0.5, %v1219
    %v1221 = vsub.f32 1.5, %v1220
    %v1222 = vmul.f32 %v1217, %v1221
    %vm1223 = vweird.f32 %v1215
    %vm1224 = vweird.f32 %v1217
    %vm1225 = vmor %vm1223, %vm1224
    %v1226 = vsel %vm1225, %v1217, %v1222
    %v1227 = vrsqrt.pop %v1216
    %v1228 = vmul.f32 %v1227, %v1216
    %v1229 = vmul.f32 %v1228, %v1227
    %v1230 = vmul.f32 0.5, %v1229
    %v1231 = vsub.f32 1.5, %v1230
    %v1232 = vmul.f32 %v1227, %v1231
    %vm1233 = vweird.f32 %v1216
    %vm1234 = vweird.f32 %v1227
    %vm1235 = vmor %vm1233, %vm1234
    %v1236 = vsel %vm1235, %v1227, %v1232
    %v1237 = vmul.f32 %v1203, %v1226
    %v1238 = vmul.f32 %v1204, %v1236
    %v1239 = vperm.slane %v35, 5
    %v1240 = vmul.f32 %v1237, %v1239
    %v1241 = vmul.f32 %v1238, %v1239
    %v1242 = vperm.slane %v35, 6
    %v1243 = vadd.f32 %v1240, %v1242
    %v1244 = vadd.f32 %v1241, %v1242
    %1245 = vst.msk [vmem:[#allocation2] sm:$0xff] %vm37, %v1243
    %1246 = vst.msk [vmem:[#allocation2 + $0x8] sm:$0xff] %vm37, %v1244
    // Predicated region
    $region34: #{tpu_custom_call.1} parent=1 // pred_check
      _
    $region35: #{tpu_custom_call.1} parent=1 // pred_check_branch
      %1248 = sbr.rel (0) target = $region37
    $region36: #{tpu_custom_call.1} parent=1 // pred_region
      %1250 = vsyncadd [#allocation3], 0
      %s1251 = sshll.u32 [#allocation2], 4
      %s1252 = int_to_ptr.vmem [resolvable:$true] %s1251
      %s1253 = sshll.u32 %s8, 4
      %s1254 = int_to_ptr.hbm [resolvable:$true] %s1253
      %1259 = dma.vmem_to_hbm [thread:$0]  %s1252, 256, %s1254, [#allocation3], 128, 128, 8
    $region37: #{tpu_custom_call.1} parent=1 // pred_fallthru
      _
    // Predicated region
    $region38: #{tpu_custom_call.1} parent=1 // pred_check
      _
    $region39: #{tpu_custom_call.1} parent=1 // pred_check_branch
      %1261 = sbr.rel (0) target = $region41
    $region40: #{tpu_custom_call.1} parent=1 // pred_region
      %1263 = dma.done [#allocation3], 256
    $region41: #{tpu_custom_call.1} parent=1 // pred_fallthru
      _
    %1264 = vsyncpa [#allocation3], 1

</llo_original>
